<compile_context>
chip_gen: v7x
topology: tpu7x:2x2x1
jax: 0.10.0
libtpu: 0.0.40
codegen_flags: <defaults>
</compile_context>

<pallas_src>
import jax
import jax.numpy as jnp
from jax.experimental import pallas as pl
from jax.experimental.pallas import tpu as pltpu


def _round_up(x, m):
    return -(-x // m) * m


def _vmem_budget_bytes():
    """~75% of per-core VMEM: ~96 MiB on v5e/v6e (128 MiB), ~48 MiB on v7x (64 MiB)."""
    phys = 64 * 1024 * 1024  # conservative fallback (v7x per-core VMEM)
    try:
        info = pltpu.get_tpu_info()
        phys = int(getattr(info, "vmem_capacity_bytes", phys) or phys)
    except Exception:
        pass
    return (phys * 3) // 4


def _choose_block_b(N, Tp, Hp, itemsize, vmem_budget, mxu_rows=256):
    """Largest batch block fitting the VMEM budget; B*Tp aligned to MXU rows
    (256 on v6e/v7x; pass mxu_rows=512 for v5e's 4x128x128 MXU) and B a
    multiple of 8 (sublane-dense output stores)."""
    # Per-batch-element VMEM bytes (double-buffered blocks + f32 intermediates):
    per_b = (2 * Tp * Hp * itemsize      # x block
             + 2 * Tp * 128 * 4          # mask block (last dim 1 pads to 128 lanes)
             + 2 * Hp * itemsize         # output block
             + 3 * Tp * Hp * 4)          # f32 h / mish / weighted-sum intermediates
    # Resident W1^T (double-buffered by the default pipeline) + b1 + w2.
    # TODO(synk): single-buffer the constant operands (pipeline_mode=pl.Buffered(1))
    # to reclaim the 2x factor below once validated on the target jax version.
    fixed = 2 * Hp * Hp * itemsize + 4 * Hp * 4
    b_fit = max((vmem_budget - fixed) // per_b, 8)
    b_align = _round_up(max(8, -(-mxu_rows // Tp)), 8)
    b = max((int(b_fit) // b_align) * b_align, b_align)
    # Don't grow the tile far past the actual batch, and prefer >=2 grid steps
    # when the batch allows it so the "parallel" axis can use both TensorCores.
    b = min(b, _round_up(max(N, 1), b_align))
    if N >= 2 * b_align:
        b = min(b, _round_up(-(-N // 2), b_align))
    return max(b, 8)


def _sap_kernel(x_ref, mask_ref, w1_ref, b1_ref, w2_ref, o_ref):
    # x_ref:    (B, T, H)  block of B batch elements, input dtype (bf16/f32)
    # mask_ref: (B, T, 1)  float mask, 1.0 = mask out
    # w1_ref:   (H, H)     = W1.T, input dtype (MXU operand)
    # b1_ref:   (1, H)     f32
    # w2_ref:   (1, H)     = W2 row, f32
    # o_ref:    (B, H)
    B, T, H = x_ref.shape
    x = x_ref[...]                                   # MXU operands stay in input dtype

    # First Linear over all B*T rows at once (fills the MXU M dimension).
    # T is padded to the dtype's sublane packing -> this reshape is layout-free.
    x2d = x.reshape(B * T, H)
    h = jnp.dot(x2d, w1_ref[...], preferred_element_type=jnp.float32) + b1_ref[...]

    # Mish(h) = h * tanh(softplus(h)) = h * q / (q + 2), q = e^h (e^h + 2):
    # one EUP exp + one EUP approx-reciprocal instead of exp + log1p + tanh.
    # For h > 20, tanh(softplus(h)) == 1 in f32 -> branch to h; the exp arg is
    # clamped so the unselected branch cannot overflow.
    p = jnp.exp(jnp.minimum(h, 20.0))
    q = p * (p + 2.0)
    m = jnp.where(h > 20.0, h, h * q * pl.reciprocal(q + 2.0, approx=True))

    # Second Linear (H -> 1) as VPU multiply + XLU lane reduce (MXU stays free).
    # The Linear(H, 1) bias is dropped: softmax is invariant to a scalar shift.
    logits = jnp.sum(m * w2_ref[...], axis=-1, keepdims=True)      # (B*T, 1)
    logits = logits.reshape(B, T, 1)                               # layout-free

    # Additive attention mask: masked positions get -1e5 (as in the reference).
    logits = logits + mask_ref[...] * (-100000.0)
    # TODO(synk): carry mask/logits lane-dense as (B, T) — needs a small
    # sublane<->lane relayout of the B*T logits; left for a follow-up.

    # Stable softmax over T (sublane axis). Denominator is only B scalars, so
    # use an exact divide for parity with the PyTorch module.
    lmax = jnp.max(logits, axis=1, keepdims=True)
    e = jnp.exp(logits - lmax)
    att_w = e / jnp.sum(e, axis=1, keepdims=True)                  # (B, T, 1)

    # Weighted sum over T: multiply in the input dtype (no f32 copy of x),
    # accumulate in f32.
    # TODO(synk): for very large T, run this on the MXU (needs lane-dense att_w).
    utter = jnp.sum(x * att_w.astype(x.dtype), axis=1, dtype=jnp.float32)
    o_ref[...] = utter.astype(o_ref.dtype)


def self_attention_pooling(batch_rep, w1, b1, w2, b2=None, att_mask=None,
                           block_b=None, vmem_budget_bytes=None):
    """batch_rep: (N, T, H); w1: (H, H); b1: (H,); w2: (1, H); b2: (1,) — b2 is
    accepted for API parity but unused (softmax is shift-invariant).
    att_mask: optional (N, T), truthy = mask this item out. Returns (N, H)."""
    N, T, H = batch_rep.shape
    dtype = batch_rep.dtype
    itemsize = jnp.dtype(dtype).itemsize
    del b2  # Linear(H,1) bias shifts every logit equally -> no effect after softmax.

    # T -> dtype sublane packing (8 f32 / 16 bf16 / 32 int8); H -> multiple of 128.
    sublane = max(8, 32 // itemsize)
    t_pad = -T % sublane
    h_pad = -H % 128
    Tp, Hp = T + t_pad, H + h_pad

    if vmem_budget_bytes is None:
        vmem_budget_bytes = _vmem_budget_bytes()
    if block_b is None:
        B = _choose_block_b(N, Tp, Hp, itemsize, vmem_budget_bytes)
    else:
        B = _round_up(max(block_b, 8), 8)
    n_pad = -N % B
    Np = N + n_pad

    # Zero-padding keeps semantics: padded H columns of x/W1/b1/w2 are zero so
    # they contribute nothing; padded batch rows / timesteps are fully masked.
    x = jnp.pad(batch_rep, ((0, n_pad), (0, t_pad), (0, h_pad)))
    if att_mask is None:
        mask = jnp.zeros((N, T), jnp.float32)
    else:
        mask = att_mask.astype(jnp.float32).reshape(N, T)
    mask = jnp.pad(mask, ((0, n_pad), (0, t_pad)), constant_values=1.0)
    mask = mask.reshape(Np, Tp, 1)

    w1t = jnp.pad(w1.T, ((0, h_pad), (0, h_pad))).astype(dtype)   # MXU operand
    b1r = jnp.pad(b1, (0, h_pad)).reshape(1, Hp).astype(jnp.float32)
    w2r = jnp.pad(w2.reshape(1, H), ((0, 0), (0, h_pad))).astype(jnp.float32)

    out = pl.pallas_call(
        _sap_kernel,
        out_shape=jax.ShapeDtypeStruct((Np, Hp), dtype),
        grid=(Np // B,),
        in_specs=[
            pl.BlockSpec((B, Tp, Hp), lambda n: (n, 0, 0)),   # batch_rep block
            pl.BlockSpec((B, Tp, 1), lambda n: (n, 0, 0)),    # additive mask block
            pl.BlockSpec((Hp, Hp), lambda n: (0, 0)),         # W1^T (resident)
            pl.BlockSpec((1, Hp), lambda n: (0, 0)),          # b1
            pl.BlockSpec((1, Hp), lambda n: (0, 0)),          # W2 row
        ],
        out_specs=pl.BlockSpec((B, Hp), lambda n: (n, 0)),
        compiler_params=pltpu.CompilerParams(
            dimension_semantics=("parallel",),
            vmem_limit_bytes=int(vmem_budget_bytes)),
    )(x, mask, w1t, b1r, w2r)
    return out[:N, :H]


def _reference(batch_rep, w1, b1, w2, b2, att_mask=None):
    # Pure-JAX reference mirroring the PyTorch forward.
    h = batch_rep @ w1.T + b1
    m = h * jnp.tanh(jnp.logaddexp(h, 0.0))          # Mish
    logits = (m @ w2.T + b2)[..., 0]                 # (N, T)
    if att_mask is not None:
        logits = logits + att_mask.astype(batch_rep.dtype) * (-100000.0)
    att_w = jax.nn.softmax(logits, axis=-1)[..., None]
    return jnp.sum(batch_rep * att_w, axis=1)


if __name__ == "__main__":
    N, T, H = 2, 8, 32
    key = jax.random.PRNGKey(0)
    kx, kw1, kb1, kw2, kb2, km = jax.random.split(key, 6)

    batch_rep = jax.random.normal(kx, (N, T, H), dtype=jnp.float32)
    # Linear(H, H) and Linear(H, 1) shaped parameters.
    w1 = jax.random.normal(kw1, (H, H), dtype=jnp.float32) * 0.1
    b1 = jax.random.normal(kb1, (H,), dtype=jnp.float32) * 0.1
    w2 = jax.random.normal(kw2, (1, H), dtype=jnp.float32) * 0.1
    b2 = jax.random.normal(kb2, (1,), dtype=jnp.float32) * 0.1
    att_mask = (jax.random.uniform(km, (N, T)) > 0.7)   # True = masked

    out = self_attention_pooling(batch_rep, w1, b1, w2, b2, att_mask)
    out = jax.block_until_ready(out)

    ref = _reference(batch_rep, w1, b1, w2, b2, att_mask)
    assert out.shape == (N, H)
    assert jnp.allclose(out, ref, atol=1e-2, rtol=1e-2)

    print("KERNEL_OK")
</pallas_src>

<mosaic_0001>
module attributes {stable_mosaic.version = 11 : i64} {
  func.func @_sap_kernel(%arg0: i32, %arg1: memref<32x8x128xf32, #tpu.memory_space<vmem>>, %arg2: memref<32x8x1xf32, #tpu.memory_space<vmem>>, %arg3: memref<128x128xf32, #tpu.memory_space<vmem>>, %arg4: memref<1x128xf32, #tpu.memory_space<vmem>>, %arg5: memref<1x128xf32, #tpu.memory_space<vmem>>, %arg6: memref<32x128xf32, #tpu.memory_space<vmem>>) attributes {dimension_semantics = [#tpu.dimension_semantics<parallel>], iteration_bounds = array<i64: 1>, scalar_prefetch = 0 : i64, scratch_operands = 0 : i64, tpu.core_type = #tpu.core_type<tc>, window_params = [{transform_indices = @transform_0, window_bounds = array<i64: 32, 8, 128>}, {transform_indices = @transform_1, window_bounds = array<i64: 32, 8, 1>}, {pipeline_mode = #tpu.pipeline_mode<synchronous>, transform_indices = @transform_2, window_bounds = array<i64: 128, 128>}, {pipeline_mode = #tpu.pipeline_mode<synchronous>, transform_indices = @transform_3, window_bounds = array<i64: 1, 128>}, {pipeline_mode = #tpu.pipeline_mode<synchronous>, transform_indices = @transform_4, window_bounds = array<i64: 1, 128>}, {transform_indices = @transform_5, window_bounds = array<i64: 32, 128>}]} {
    %c0 = arith.constant 0 : index
    %c0_0 = arith.constant 0 : index
    %c0_1 = arith.constant 0 : index
    %0 = vector.load %arg1[%c0, %c0_0, %c0_1] : memref<32x8x128xf32, #tpu.memory_space<vmem>>, vector<32x8x128xf32>
    %1 = vector.shape_cast %0 : vector<32x8x128xf32> to vector<256x128xf32>
    %c0_2 = arith.constant 0 : index
    %c0_3 = arith.constant 0 : index
    %2 = vector.load %arg3[%c0_2, %c0_3] : memref<128x128xf32, #tpu.memory_space<vmem>>, vector<128x128xf32>
    %cst = arith.constant dense<0.000000e+00> : vector<256x128xf32>
    %3 = tpu.matmul %1, %2, %cst {dimension_numbers = #tpu.dot_dimension_numbers<[1], [0], [0], [1], [0, 0, 1, 1], [], []>} : vector<256x128xf32>, vector<128x128xf32>, vector<256x128xf32> -> vector<256x128xf32>
    %c0_4 = arith.constant 0 : index
    %c0_5 = arith.constant 0 : index
    %4 = vector.load %arg4[%c0_4, %c0_5] : memref<1x128xf32, #tpu.memory_space<vmem>>, vector<1x128xf32>
    %5 = vector.broadcast %4 : vector<1x128xf32> to vector<256x128xf32>
    %6 = arith.addf %3, %5 : vector<256x128xf32>
    %cst_6 = arith.constant 2.000000e+01 : f32
    %7 = vector.broadcast %cst_6 : f32 to vector<256x128xf32>
    %8 = arith.minimumf %6, %7 : vector<256x128xf32>
    %9 = math.exp %8 : vector<256x128xf32>
    %cst_7 = arith.constant 2.000000e+00 : f32
    %10 = vector.broadcast %cst_7 : f32 to vector<256x128xf32>
    %11 = arith.addf %9, %10 : vector<256x128xf32>
    %12 = arith.mulf %9, %11 : vector<256x128xf32>
    %cst_8 = arith.constant 2.000000e+01 : f32
    %13 = vector.broadcast %cst_8 : f32 to vector<256x128xf32>
    %14 = arith.cmpf ogt, %6, %13 : vector<256x128xf32>
    %15 = arith.mulf %6, %12 : vector<256x128xf32>
    %cst_9 = arith.constant 2.000000e+00 : f32
    %16 = vector.broadcast %cst_9 : f32 to vector<256x128xf32>
    %17 = arith.addf %12, %16 : vector<256x128xf32>
    %18 = tpu.reciprocal %17 {approx = true} : vector<256x128xf32> -> vector<256x128xf32>
    %19 = arith.mulf %15, %18 : vector<256x128xf32>
    %20 = arith.select %14, %6, %19 : vector<256x128xi1>, vector<256x128xf32>
    %c0_10 = arith.constant 0 : index
    %c0_11 = arith.constant 0 : index
    %21 = vector.load %arg5[%c0_10, %c0_11] : memref<1x128xf32, #tpu.memory_space<vmem>>, vector<1x128xf32>
    %22 = vector.broadcast %21 : vector<1x128xf32> to vector<256x128xf32>
    %23 = arith.mulf %20, %22 : vector<256x128xf32>
    %cst_12 = arith.constant dense<0.000000e+00> : vector<256xf32>
    %24 = vector.multi_reduction <add>, %23, %cst_12 [1] : vector<256x128xf32> to vector<256xf32>
    %25 = vector.shape_cast %24 : vector<256xf32> to vector<256x1xf32>
    %26 = vector.shape_cast %25 : vector<256x1xf32> to vector<32x8x1xf32>
    %c0_13 = arith.constant 0 : index
    %c0_14 = arith.constant 0 : index
    %c0_15 = arith.constant 0 : index
    %27 = vector.load %arg2[%c0_13, %c0_14, %c0_15] : memref<32x8x1xf32, #tpu.memory_space<vmem>>, vector<32x8x1xf32>
    %cst_16 = arith.constant -1.000000e+05 : f32
    %28 = vector.broadcast %cst_16 : f32 to vector<32x8x1xf32>
    %29 = arith.mulf %27, %28 : vector<32x8x1xf32>
    %30 = arith.addf %26, %29 : vector<32x8x1xf32>
    %cst_17 = arith.constant dense<0xFF800000> : vector<32x1xf32>
    %31 = vector.multi_reduction <maximumf>, %30, %cst_17 [1] : vector<32x8x1xf32> to vector<32x1xf32>
    %32 = vector.shape_cast %31 : vector<32x1xf32> to vector<32x1x1xf32>
    %33 = vector.broadcast %32 : vector<32x1x1xf32> to vector<32x8x1xf32>
    %34 = arith.subf %30, %33 : vector<32x8x1xf32>
    %35 = math.exp %34 : vector<32x8x1xf32>
    %cst_18 = arith.constant dense<0.000000e+00> : vector<32x1xf32>
    %36 = vector.multi_reduction <add>, %35, %cst_18 [1] : vector<32x8x1xf32> to vector<32x1xf32>
    %37 = vector.shape_cast %36 : vector<32x1xf32> to vector<32x1x1xf32>
    %38 = vector.broadcast %37 : vector<32x1x1xf32> to vector<32x8x1xf32>
    %39 = arith.divf %35, %38 : vector<32x8x1xf32>
    %40 = vector.broadcast %39 : vector<32x8x1xf32> to vector<32x8x128xf32>
    %41 = arith.mulf %0, %40 : vector<32x8x128xf32>
    %cst_19 = arith.constant dense<0.000000e+00> : vector<32x128xf32>
    %42 = vector.multi_reduction <add>, %41, %cst_19 [1] : vector<32x8x128xf32> to vector<32x128xf32>
    %c0_20 = arith.constant 0 : index
    %c0_21 = arith.constant 0 : index
    %43 = vector.load %arg6[%c0_20, %c0_21] : memref<32x128xf32, #tpu.memory_space<vmem>>, vector<32x128xf32>
    tpu.vector_store %arg6[%c0_20, %c0_21], %42 {strides = array<i32>} : memref<32x128xf32, #tpu.memory_space<vmem>>, vector<32x128xf32>,
    return
  }
  func.func @transform_0(%arg0: i32) -> (i32, i32, i32) {
    %c0_i32 = arith.constant 0 : i32
    %c0_i32_0 = arith.constant 0 : i32
    %c0_i32_1 = arith.constant 0 : i32
    return %arg0, %c0_i32, %c0_i32_0 : i32, i32, i32
  }
  func.func @transform_1(%arg0: i32) -> (i32, i32, i32) {
    %c0_i32 = arith.constant 0 : i32
    %c0_i32_0 = arith.constant 0 : i32
    %c0_i32_1 = arith.constant 0 : i32
    return %arg0, %c0_i32, %c0_i32_0 : i32, i32, i32
  }
  func.func @transform_2(%arg0: i32) -> (i32, i32) {
    %c0_i32 = arith.constant 0 : i32
    %c0_i32_0 = arith.constant 0 : i32
    %c0_i32_1 = arith.constant 0 : i32
    return %c0_i32, %c0_i32_0 : i32, i32
  }
  func.func @transform_3(%arg0: i32) -> (i32, i32) {
    %c0_i32 = arith.constant 0 : i32
    %c0_i32_0 = arith.constant 0 : i32
    %c0_i32_1 = arith.constant 0 : i32
    return %c0_i32, %c0_i32_0 : i32, i32
  }
  func.func @transform_4(%arg0: i32) -> (i32, i32) {
    %c0_i32 = arith.constant 0 : i32
    %c0_i32_0 = arith.constant 0 : i32
    %c0_i32_1 = arith.constant 0 : i32
    return %c0_i32, %c0_i32_0 : i32, i32
  }
  func.func @transform_5(%arg0: i32) -> (i32, i32) {
    %c0_i32 = arith.constant 0 : i32
    %c0_i32_0 = arith.constant 0 : i32
    return %arg0, %c0_i32 : i32, i32
  }
}

</mosaic_0001>

<llo_original>
// kernel: tpu_custom_call.1
$region0: #{tpu_custom_call.1}
  #allocation0 [shape = 'u32[]', space=smem, size = 0x4, offset = 0x4, fixed_abs, tag = 'smem constant byte address 0x4 - core index']
  #allocation1 [shape = 'u32[144,128]{1,0:T(1,128)}', space=vmem, size = 0x12000, scoped, tag = 'internal scratch']
  %s0 = inlined_call_operand.vmem [shape: f32[32,8,128], index: 0, kind: input, shape index: {}]
  %s1 = inlined_call_operand.vmem [shape: f32[32,8,1], index: 1, kind: input, shape index: {}]
  %s2 = inlined_call_operand.hbm [shape: f32[128,128], index: 2, kind: input, shape index: {}]
  %s3 = inlined_call_operand.vmem [shape: f32[1,128], index: 3, kind: input, shape index: {}]
  %s4 = inlined_call_operand.vmem [shape: f32[1,128], index: 4, kind: input, shape index: {}]
  %s5 = inlined_call_operand.hbm [shape: f32[32,128], index: 5, kind: output, shape index: {}]
  %s6 = sld [smem:[#allocation0]]
  $region34: #{tpu_custom_call.1} parent=0
    _
  %s8 = ssub.s32 1, %s6
  %s9 = scalar_select 0, %s8, %s6
  $region1: #{tpu_custom_call.1} parent=0
    #allocation2 [shape = 'u8[65536]{0}', space=vmem, size = 0x10000, scoped, tag = 'input window, operand 2, single buffered']
    #allocation3 [shape = 's32[1]{0}', space=sflag, size = 0x4, scoped, tag = 'scoped memory for tpu_custom_call.1']
    #allocation4 [shape = 's32[1]{0}', space=sflag, size = 0x4, scoped, tag = 'scoped memory for tpu_custom_call.1']
    #allocation5 [shape = 'u8[16384]{0}', space=vmem, size = 0x4000, scoped, tag = 'output window, operand 0, single buffered']
    %10 = vsyncpa [#allocation3], 0
    %11 = vsyncpa [#allocation4], 0
    // Predicated region
    $region2: #{tpu_custom_call.1} parent=1 // pred_check
      _
    $region3: #{tpu_custom_call.1} parent=1 // pred_check_branch
      %13 = sbr.rel (0) target = $region5
    $region4: #{tpu_custom_call.1} parent=1 // pred_region
      _
    $region5: #{tpu_custom_call.1} parent=1 // pred_fallthru
      _
    // Predicated region
    $region6: #{tpu_custom_call.1} parent=1 // pred_check
      _
    $region7: #{tpu_custom_call.1} parent=1 // pred_check_branch
      %15 = sbr.rel (0) target = $region9
    $region8: #{tpu_custom_call.1} parent=1 // pred_region
      _
    $region9: #{tpu_custom_call.1} parent=1 // pred_fallthru
      _
    // Predicated region
    $region10: #{tpu_custom_call.1} parent=1 // pred_check
      _
    $region11: #{tpu_custom_call.1} parent=1 // pred_check_branch
      %17 = sbr.rel (0) target = $region13
    $region12: #{tpu_custom_call.1} parent=1 // pred_region
      %s19 = ssub.s32 2048, 2048
      %20 = vsyncadd [#allocation3], %s19
      %s21 = sshll.u32 [#allocation2], 4
      %s22 = int_to_ptr.vmem [resolvable:$true] %s21
      %27 = dma.hbm_to_vmem [thread:$0]  %s2, 2048, %s22, [#allocation3], 128, 128, 8
    $region13: #{tpu_custom_call.1} parent=1 // pred_fallthru
      _
    // Predicated region
    $region14: #{tpu_custom_call.1} parent=1 // pred_check
      _
    $region15: #{tpu_custom_call.1} parent=1 // pred_check_branch
      %29 = sbr.rel (0) target = $region17
    $region16: #{tpu_custom_call.1} parent=1 // pred_region
      _
    $region17: #{tpu_custom_call.1} parent=1 // pred_fallthru
      _
    // Predicated region
    $region18: #{tpu_custom_call.1} parent=1 // pred_check
      _
    $region19: #{tpu_custom_call.1} parent=1 // pred_check_branch
      %31 = sbr.rel (0) target = $region21
    $region20: #{tpu_custom_call.1} parent=1 // pred_region
      _
    $region21: #{tpu_custom_call.1} parent=1 // pred_fallthru
      _
    // Predicated region
    $region22: #{tpu_custom_call.1} parent=1 // pred_check
      _
    $region23: #{tpu_custom_call.1} parent=1 // pred_check_branch
      %33 = sbr.rel (0) target = $region25
    $region24: #{tpu_custom_call.1} parent=1 // pred_region
      %34 = dma.done [#allocation3], 2048
    $region25: #{tpu_custom_call.1} parent=1 // pred_fallthru
      _
    %v35 = vld [vmem:[%s0] sm:$0xff]
    %v36 = vld [vmem:[%s0 + $0x8] sm:$0xff]
    %v37 = vld [vmem:[%s0 + $0x10] sm:$0xff]
    %v38 = vld [vmem:[%s0 + $0x18] sm:$0xff]
    %v39 = vld [vmem:[%s0 + $0x20] sm:$0xff]
    %v40 = vld [vmem:[%s0 + $0x28] sm:$0xff]
    %v41 = vld [vmem:[%s0 + $0x30] sm:$0xff]
    %v42 = vld [vmem:[%s0 + $0x38] sm:$0xff]
    %v43 = vld [vmem:[%s0 + $0x40] sm:$0xff]
    %v44 = vld [vmem:[%s0 + $0x48] sm:$0xff]
    %v45 = vld [vmem:[%s0 + $0x50] sm:$0xff]
    %v46 = vld [vmem:[%s0 + $0x58] sm:$0xff]
    %v47 = vld [vmem:[%s0 + $0x60] sm:$0xff]
    %v48 = vld [vmem:[%s0 + $0x68] sm:$0xff]
    %v49 = vld [vmem:[%s0 + $0x70] sm:$0xff]
    %v50 = vld [vmem:[%s0 + $0x78] sm:$0xff]
    %v51 = vld [vmem:[%s0 + $0x80] sm:$0xff]
    %v52 = vld [vmem:[%s0 + $0x88] sm:$0xff]
    %v53 = vld [vmem:[%s0 + $0x90] sm:$0xff]
    %v54 = vld [vmem:[%s0 + $0x98] sm:$0xff]
    %v55 = vld [vmem:[%s0 + $0xa0] sm:$0xff]
    %v56 = vld [vmem:[%s0 + $0xa8] sm:$0xff]
    %v57 = vld [vmem:[%s0 + $0xb0] sm:$0xff]
    %v58 = vld [vmem:[%s0 + $0xb8] sm:$0xff]
    %v59 = vld [vmem:[%s0 + $0xc0] sm:$0xff]
    %v60 = vld [vmem:[%s0 + $0xc8] sm:$0xff]
    %v61 = vld [vmem:[%s0 + $0xd0] sm:$0xff]
    %v62 = vld [vmem:[%s0 + $0xd8] sm:$0xff]
    %v63 = vld [vmem:[%s0 + $0xe0] sm:$0xff]
    %v64 = vld [vmem:[%s0 + $0xe8] sm:$0xff]
    %v65 = vld [vmem:[%s0 + $0xf0] sm:$0xff]
    %v66 = vld [vmem:[%s0 + $0xf8] sm:$0xff]
    %v67 = vld [vmem:[#allocation2] sm:$0xff]
    %v68 = vld [vmem:[#allocation2 + $0x8] sm:$0xff]
    %v69 = vld [vmem:[#allocation2 + $0x10] sm:$0xff]
    %v70 = vld [vmem:[#allocation2 + $0x18] sm:$0xff]
    %v71 = vld [vmem:[#allocation2 + $0x20] sm:$0xff]
    %v72 = vld [vmem:[#allocation2 + $0x28] sm:$0xff]
    %v73 = vld [vmem:[#allocation2 + $0x30] sm:$0xff]
    %v74 = vld [vmem:[#allocation2 + $0x38] sm:$0xff]
    %v75 = vld [vmem:[#allocation2 + $0x40] sm:$0xff]
    %v76 = vld [vmem:[#allocation2 + $0x48] sm:$0xff]
    %v77 = vld [vmem:[#allocation2 + $0x50] sm:$0xff]
    %v78 = vld [vmem:[#allocation2 + $0x58] sm:$0xff]
    %v79 = vld [vmem:[#allocation2 + $0x60] sm:$0xff]
    %v80 = vld [vmem:[#allocation2 + $0x68] sm:$0xff]
    %v81 = vld [vmem:[#allocation2 + $0x70] sm:$0xff]
    %v82 = vld [vmem:[#allocation2 + $0x78] sm:$0xff]
    %v83 = vld [vmem:[%s3] sm:$0x1]
    %v85 = vlaneseq
    %v86 = vshrl.u32 %v85, 7
    %v87 = vsub.s32 0, %v86
    %v88 = vrot.slane %v83, %v87
    %90 = vmatprep.subr.mxu0 0.0
    %91 = vmatpush1.msra.mxu0 %v67
    %92 = vmatprep.subr.mxu0 0.0
    %93 = vmatpush1.msra.mxu0 %v68
    %94 = vmatprep.subr.mxu0 0.0
    %95 = vmatpush1.msra.mxu0 %v69
    %96 = vmatprep.subr.mxu0 0.0
    %97 = vmatpush1.msra.mxu0 %v70
    %98 = vmatprep.subr.mxu0 0.0
    %99 = vmatpush1.msra.mxu0 %v71
    %100 = vmatprep.subr.mxu0 0.0
    %101 = vmatpush1.msra.mxu0 %v72
    %102 = vmatprep.subr.mxu0 0.0
    %103 = vmatpush1.msra.mxu0 %v73
    %104 = vmatprep.subr.mxu0 0.0
    %105 = vmatpush1.msra.mxu0 %v74
    %106 = vmatprep.subr.mxu0 0.0
    %107 = vmatpush1.msra.mxu0 %v75
    %108 = vmatprep.subr.mxu0 0.0
    %109 = vmatpush1.msra.mxu0 %v76
    %110 = vmatprep.subr.mxu0 0.0
    %111 = vmatpush1.msra.mxu0 %v77
    %112 = vmatprep.subr.mxu0 0.0
    %113 = vmatpush1.msra.mxu0 %v78
    %114 = vmatprep.subr.mxu0 0.0
    %115 = vmatpush1.msra.mxu0 %v79
    %116 = vmatprep.subr.mxu0 0.0
    %117 = vmatpush1.msra.mxu0 %v80
    %118 = vmatprep.subr.mxu0 0.0
    %119 = vmatpush1.msra.mxu0 %v81
    %120 = vmatprep.subr.mxu0 0.0
    %121 = vmatpush1.msra.mxu0 %v82
    %122 = vmatprep.subr.mxu0 0.0
    %123 = vmatpush1.msra.mxu0 0.0
    %124 = vmatprep.subr.mxu0 0.0
    %125 = vmatpush1.msra.mxu0 0.0
    %126 = vmatprep.subr.mxu0 0.0
    %127 = vmatpush1.msra.mxu0 0.0
    %128 = vmatprep.subr.mxu0 0.0
    %129 = vmatpush1.msra.mxu0 0.0
    %130 = vmatprep.subr.mxu0 0.0
    %131 = vmatpush1.msra.mxu0 0.0
    %132 = vmatprep.subr.mxu0 0.0
    %133 = vmatpush1.msra.mxu0 0.0
    %134 = vmatprep.subr.mxu0 0.0
    %135 = vmatpush1.msra.mxu0 0.0
    %136 = vmatprep.subr.mxu0 0.0
    %137 = vmatpush1.msra.mxu0 0.0
    %138 = vmatprep.subr.mxu0 0.0
    %139 = vmatpush1.msra.mxu0 0.0
    %140 = vmatprep.subr.mxu0 0.0
    %141 = vmatpush1.msra.mxu0 0.0
    %142 = vmatprep.subr.mxu0 0.0
    %143 = vmatpush1.msra.mxu0 0.0
    %144 = vmatprep.subr.mxu0 0.0
    %145 = vmatpush1.msra.mxu0 0.0
    %146 = vmatprep.subr.mxu0 0.0
    %147 = vmatpush1.msra.mxu0 0.0
    %148 = vmatprep.subr.mxu0 0.0
    %149 = vmatpush1.msra.mxu0 0.0
    %150 = vmatprep.subr.mxu0 0.0
    %151 = vmatpush1.msra.mxu0 0.0
    %152 = vmatprep.subr.mxu0 0.0
    %153 = vmatpush1.msra.mxu0 0.0
    %154 = vmatprep.mubr.f32.mxu0 0.0
    %155 = vmatmul.mubr.f32.gmra.mrb[0].mxu0 %v35
    %v156 = vpop.f32.mrb[0].mxu0
    %v157 = vadd.f32 %v88, %v156
    %v158 = vpop.f32.mrb[0].mxu0
    %159 = vmatprep.mubr.f32.mxu0 0.0
    %160 = vmatmul.mubr.f32.gmra.mrb[0].mxu0 %v36
    %v161 = vpop.f32.mrb[0].mxu0
    %v162 = vadd.f32 %v88, %v161
    %v163 = vpop.f32.mrb[0].mxu0
    %164 = vmatprep.mubr.f32.mxu0 0.0
    %165 = vmatmul.mubr.f32.gmra.mrb[0].mxu0 %v37
    %v166 = vpop.f32.mrb[0].mxu0
    %v167 = vadd.f32 %v88, %v166
    %v168 = vpop.f32.mrb[0].mxu0
    %169 = vmatprep.mubr.f32.mxu0 0.0
    %170 = vmatmul.mubr.f32.gmra.mrb[0].mxu0 %v38
    %v171 = vpop.f32.mrb[0].mxu0
    %v172 = vadd.f32 %v88, %v171
    %v173 = vpop.f32.mrb[0].mxu0
    %174 = vmatprep.mubr.f32.mxu0 0.0
    %175 = vmatmul.mubr.f32.gmra.mrb[0].mxu0 %v39
    %v176 = vpop.f32.mrb[0].mxu0
    %v177 = vadd.f32 %v88, %v176
    %v178 = vpop.f32.mrb[0].mxu0
    %179 = vmatprep.mubr.f32.mxu0 0.0
    %180 = vmatmul.mubr.f32.gmra.mrb[0].mxu0 %v40
    %v181 = vpop.f32.mrb[0].mxu0
    %v182 = vadd.f32 %v88, %v181
    %v183 = vpop.f32.mrb[0].mxu0
    %184 = vmatprep.mubr.f32.mxu0 0.0
    %185 = vmatmul.mubr.f32.gmra.mrb[0].mxu0 %v41
    %v186 = vpop.f32.mrb[0].mxu0
    %v187 = vadd.f32 %v88, %v186
    %v188 = vpop.f32.mrb[0].mxu0
    %189 = vmatprep.mubr.f32.mxu0 0.0
    %190 = vmatmul.mubr.f32.gmra.mrb[0].mxu0 %v42
    %v191 = vpop.f32.mrb[0].mxu0
    %v192 = vadd.f32 %v88, %v191
    %v193 = vpop.f32.mrb[0].mxu0
    %194 = vmatprep.mubr.f32.mxu0 0.0
    %195 = vmatmul.mubr.f32.gmra.mrb[0].mxu0 %v43
    %v196 = vpop.f32.mrb[0].mxu0
    %v197 = vadd.f32 %v88, %v196
    %v198 = vpop.f32.mrb[0].mxu0
    %199 = vmatprep.mubr.f32.mxu0 0.0
    %200 = vmatmul.mubr.f32.gmra.mrb[0].mxu0 %v44
    %v201 = vpop.f32.mrb[0].mxu0
    %v202 = vadd.f32 %v88, %v201
    %v203 = vpop.f32.mrb[0].mxu0
    %204 = vmatprep.mubr.f32.mxu0 0.0
    %205 = vmatmul.mubr.f32.gmra.mrb[0].mxu0 %v45
    %v206 = vpop.f32.mrb[0].mxu0
    %v207 = vadd.f32 %v88, %v206
    %v208 = vpop.f32.mrb[0].mxu0
    %209 = vmatprep.mubr.f32.mxu0 0.0
    %210 = vmatmul.mubr.f32.gmra.mrb[0].mxu0 %v46
    %v211 = vpop.f32.mrb[0].mxu0
    %v212 = vadd.f32 %v88, %v211
    %v213 = vpop.f32.mrb[0].mxu0
    %214 = vmatprep.mubr.f32.mxu0 0.0
    %215 = vmatmul.mubr.f32.gmra.mrb[0].mxu0 %v47
    %v216 = vpop.f32.mrb[0].mxu0
    %v217 = vadd.f32 %v88, %v216
    %v218 = vpop.f32.mrb[0].mxu0
    %219 = vmatprep.mubr.f32.mxu0 0.0
    %220 = vmatmul.mubr.f32.gmra.mrb[0].mxu0 %v48
    %v221 = vpop.f32.mrb[0].mxu0
    %v222 = vadd.f32 %v88, %v221
    %v223 = vpop.f32.mrb[0].mxu0
    %224 = vmatprep.mubr.f32.mxu0 0.0
    %225 = vmatmul.mubr.f32.gmra.mrb[0].mxu0 %v49
    %v226 = vpop.f32.mrb[0].mxu0
    %v227 = vadd.f32 %v88, %v226
    %v228 = vpop.f32.mrb[0].mxu0
    %229 = vmatprep.mubr.f32.mxu0 0.0
    %230 = vmatmul.mubr.f32.gmra.mrb[0].mxu0 %v50
    %v231 = vpop.f32.mrb[0].mxu0
    %v232 = vadd.f32 %v88, %v231
    %v233 = vpop.f32.mrb[0].mxu0
    %234 = vmatprep.mubr.f32.mxu0 0.0
    %235 = vmatmul.mubr.f32.gmra.mrb[0].mxu0 %v51
    %v236 = vpop.f32.mrb[0].mxu0
    %v237 = vadd.f32 %v88, %v236
    %v238 = vpop.f32.mrb[0].mxu0
    %239 = vmatprep.mubr.f32.mxu0 0.0
    %240 = vmatmul.mubr.f32.gmra.mrb[0].mxu0 %v52
    %v241 = vpop.f32.mrb[0].mxu0
    %v242 = vadd.f32 %v88, %v241
    %v243 = vpop.f32.mrb[0].mxu0
    %244 = vmatprep.mubr.f32.mxu0 0.0
    %245 = vmatmul.mubr.f32.gmra.mrb[0].mxu0 %v53
    %v246 = vpop.f32.mrb[0].mxu0
    %v247 = vadd.f32 %v88, %v246
    %v248 = vpop.f32.mrb[0].mxu0
    %249 = vmatprep.mubr.f32.mxu0 0.0
    %250 = vmatmul.mubr.f32.gmra.mrb[0].mxu0 %v54
    %v251 = vpop.f32.mrb[0].mxu0
    %v252 = vadd.f32 %v88, %v251
    %v253 = vpop.f32.mrb[0].mxu0
    %254 = vmatprep.mubr.f32.mxu0 0.0
    %255 = vmatmul.mubr.f32.gmra.mrb[0].mxu0 %v55
    %v256 = vpop.f32.mrb[0].mxu0
    %v257 = vadd.f32 %v88, %v256
    %v258 = vpop.f32.mrb[0].mxu0
    %259 = vmatprep.mubr.f32.mxu0 0.0
    %260 = vmatmul.mubr.f32.gmra.mrb[0].mxu0 %v56
    %v261 = vpop.f32.mrb[0].mxu0
    %v262 = vadd.f32 %v88, %v261
    %v263 = vpop.f32.mrb[0].mxu0
    %264 = vmatprep.mubr.f32.mxu0 0.0
    %265 = vmatmul.mubr.f32.gmra.mrb[0].mxu0 %v57
    %v266 = vpop.f32.mrb[0].mxu0
    %v267 = vadd.f32 %v88, %v266
    %v268 = vpop.f32.mrb[0].mxu0
    %269 = vmatprep.mubr.f32.mxu0 0.0
    %270 = vmatmul.mubr.f32.gmra.mrb[0].mxu0 %v58
    %v271 = vpop.f32.mrb[0].mxu0
    %v272 = vadd.f32 %v88, %v271
    %v273 = vpop.f32.mrb[0].mxu0
    %274 = vmatprep.mubr.f32.mxu0 0.0
    %275 = vmatmul.mubr.f32.gmra.mrb[0].mxu0 %v59
    %v276 = vpop.f32.mrb[0].mxu0
    %v277 = vadd.f32 %v88, %v276
    %v278 = vpop.f32.mrb[0].mxu0
    %279 = vmatprep.mubr.f32.mxu0 0.0
    %280 = vmatmul.mubr.f32.gmra.mrb[0].mxu0 %v60
    %v281 = vpop.f32.mrb[0].mxu0
    %v282 = vadd.f32 %v88, %v281
    %v283 = vpop.f32.mrb[0].mxu0
    %284 = vmatprep.mubr.f32.mxu0 0.0
    %285 = vmatmul.mubr.f32.gmra.mrb[0].mxu0 %v61
    %v286 = vpop.f32.mrb[0].mxu0
    %v287 = vadd.f32 %v88, %v286
    %v288 = vpop.f32.mrb[0].mxu0
    %289 = vmatprep.mubr.f32.mxu0 0.0
    %290 = vmatmul.mubr.f32.gmra.mrb[0].mxu0 %v62
    %v291 = vpop.f32.mrb[0].mxu0
    %v292 = vadd.f32 %v88, %v291
    %v293 = vpop.f32.mrb[0].mxu0
    %294 = vmatprep.mubr.f32.mxu0 0.0
    %295 = vmatmul.mubr.f32.gmra.mrb[0].mxu0 %v63
    %v296 = vpop.f32.mrb[0].mxu0
    %v297 = vadd.f32 %v88, %v296
    %v298 = vpop.f32.mrb[0].mxu0
    %299 = vmatprep.mubr.f32.mxu0 0.0
    %300 = vmatmul.mubr.f32.gmra.mrb[0].mxu0 %v64
    %v301 = vpop.f32.mrb[0].mxu0
    %v302 = vadd.f32 %v88, %v301
    %v303 = vpop.f32.mrb[0].mxu0
    %304 = vmatprep.mubr.f32.mxu0 0.0
    %305 = vmatmul.mubr.f32.gmra.mrb[0].mxu0 %v65
    %v306 = vpop.f32.mrb[0].mxu0
    %v307 = vadd.f32 %v88, %v306
    %v308 = vpop.f32.mrb[0].mxu0
    %309 = vmatprep.mubr.f32.mxu0 0.0
    %310 = vmatmul.mubr.f32.gmra.mrb[0].mxu0 %v66
    %v311 = vpop.f32.mrb[0].mxu0
    %v312 = vadd.f32 %v88, %v311
    %v313 = vpop.f32.mrb[0].mxu0
    %314 = vdwg.mxu0
    %v315 = vmin.f32 %v157, 20.0
    %v316 = vmin.f32 %v162, 20.0
    %v317 = vmin.f32 %v167, 20.0
    %v318 = vmin.f32 %v172, 20.0
    %v319 = vmin.f32 %v177, 20.0
    %v320 = vmin.f32 %v182, 20.0
    %v321 = vmin.f32 %v187, 20.0
    %v322 = vmin.f32 %v192, 20.0
    %v323 = vmin.f32 %v197, 20.0
    %v324 = vmin.f32 %v202, 20.0
    %v325 = vmin.f32 %v207, 20.0
    %v326 = vmin.f32 %v212, 20.0
    %v327 = vmin.f32 %v217, 20.0
    %v328 = vmin.f32 %v222, 20.0
    %v329 = vmin.f32 %v227, 20.0
    %v330 = vmin.f32 %v232, 20.0
    %v331 = vmin.f32 %v237, 20.0
    %v332 = vmin.f32 %v242, 20.0
    %v333 = vmin.f32 %v247, 20.0
    %v334 = vmin.f32 %v252, 20.0
    %v335 = vmin.f32 %v257, 20.0
    %v336 = vmin.f32 %v262, 20.0
    %v337 = vmin.f32 %v267, 20.0
    %v338 = vmin.f32 %v272, 20.0
    %v339 = vmin.f32 %v277, 20.0
    %v340 = vmin.f32 %v282, 20.0
    %v341 = vmin.f32 %v287, 20.0
    %v342 = vmin.f32 %v292, 20.0
    %v343 = vmin.f32 %v297, 20.0
    %v344 = vmin.f32 %v302, 20.0
    %v345 = vmin.f32 %v307, 20.0
    %v346 = vmin.f32 %v312, 20.0
    %v347 = vmul.f32 %v315, 1.442695
    %v348 = vpow.pop %v347
    %v349 = vmul.f32 %v316, 1.442695
    %v350 = vpow.pop %v349
    %v351 = vmul.f32 %v317, 1.442695
    %v352 = vpow.pop %v351
    %v353 = vmul.f32 %v318, 1.442695
    %v354 = vpow.pop %v353
    %v355 = vmul.f32 %v319, 1.442695
    %v356 = vpow.pop %v355
    %v357 = vmul.f32 %v320, 1.442695
    %v358 = vpow.pop %v357
    %v359 = vmul.f32 %v321, 1.442695
    %v360 = vpow.pop %v359
    %v361 = vmul.f32 %v322, 1.442695
    %v362 = vpow.pop %v361
    %v363 = vmul.f32 %v323, 1.442695
    %v364 = vpow.pop %v363
    %v365 = vmul.f32 %v324, 1.442695
    %v366 = vpow.pop %v365
    %v367 = vmul.f32 %v325, 1.442695
    %v368 = vpow.pop %v367
    %v369 = vmul.f32 %v326, 1.442695
    %v370 = vpow.pop %v369
    %v371 = vmul.f32 %v327, 1.442695
    %v372 = vpow.pop %v371
    %v373 = vmul.f32 %v328, 1.442695
    %v374 = vpow.pop %v373
    %v375 = vmul.f32 %v329, 1.442695
    %v376 = vpow.pop %v375
    %v377 = vmul.f32 %v330, 1.442695
    %v378 = vpow.pop %v377
    %v379 = vmul.f32 %v331, 1.442695
    %v380 = vpow.pop %v379
    %v381 = vmul.f32 %v332, 1.442695
    %v382 = vpow.pop %v381
    %v383 = vmul.f32 %v333, 1.442695
    %v384 = vpow.pop %v383
    %v385 = vmul.f32 %v334, 1.442695
    %v386 = vpow.pop %v385
    %v387 = vmul.f32 %v335, 1.442695
    %v388 = vpow.pop %v387
    %v389 = vmul.f32 %v336, 1.442695
    %v390 = vpow.pop %v389
    %v391 = vmul.f32 %v337, 1.442695
    %v392 = vpow.pop %v391
    %v393 = vmul.f32 %v338, 1.442695
    %v394 = vpow.pop %v393
    %v395 = vmul.f32 %v339, 1.442695
    %v396 = vpow.pop %v395
    %v397 = vmul.f32 %v340, 1.442695
    %v398 = vpow.pop %v397
    %v399 = vmul.f32 %v341, 1.442695
    %v400 = vpow.pop %v399
    %v401 = vmul.f32 %v342, 1.442695
    %v402 = vpow.pop %v401
    %v403 = vmul.f32 %v343, 1.442695
    %v404 = vpow.pop %v403
    %v405 = vmul.f32 %v344, 1.442695
    %v406 = vpow.pop %v405
    %v407 = vmul.f32 %v345, 1.442695
    %v408 = vpow.pop %v407
    %v409 = vmul.f32 %v346, 1.442695
    %v410 = vpow.pop %v409
    %v411 = vadd.f32 %v348, 2.0
    %v412 = vadd.f32 %v350, 2.0
    %v413 = vadd.f32 %v352, 2.0
    %v414 = vadd.f32 %v354, 2.0
    %v415 = vadd.f32 %v356, 2.0
    %v416 = vadd.f32 %v358, 2.0
    %v417 = vadd.f32 %v360, 2.0
    %v418 = vadd.f32 %v362, 2.0
    %v419 = vadd.f32 %v364, 2.0
    %v420 = vadd.f32 %v366, 2.0
    %v421 = vadd.f32 %v368, 2.0
    %v422 = vadd.f32 %v370, 2.0
    %v423 = vadd.f32 %v372, 2.0
    %v424 = vadd.f32 %v374, 2.0
    %v425 = vadd.f32 %v376, 2.0
    %v426 = vadd.f32 %v378, 2.0
    %v427 = vadd.f32 %v380, 2.0
    %v428 = vadd.f32 %v382, 2.0
    %v429 = vadd.f32 %v384, 2.0
    %v430 = vadd.f32 %v386, 2.0
    %v431 = vadd.f32 %v388, 2.0
    %v432 = vadd.f32 %v390, 2.0
    %v433 = vadd.f32 %v392, 2.0
    %v434 = vadd.f32 %v394, 2.0
    %v435 = vadd.f32 %v396, 2.0
    %v436 = vadd.f32 %v398, 2.0
    %v437 = vadd.f32 %v400, 2.0
    %v438 = vadd.f32 %v402, 2.0
    %v439 = vadd.f32 %v404, 2.0
    %v440 = vadd.f32 %v406, 2.0
    %v441 = vadd.f32 %v408, 2.0
    %v442 = vadd.f32 %v410, 2.0
    %v443 = vmul.f32 %v348, %v411
    %v444 = vmul.f32 %v350, %v412
    %v445 = vmul.f32 %v352, %v413
    %v446 = vmul.f32 %v354, %v414
    %v447 = vmul.f32 %v356, %v415
    %v448 = vmul.f32 %v358, %v416
    %v449 = vmul.f32 %v360, %v417
    %v450 = vmul.f32 %v362, %v418
    %v451 = vmul.f32 %v364, %v419
    %v452 = vmul.f32 %v366, %v420
    %v453 = vmul.f32 %v368, %v421
    %v454 = vmul.f32 %v370, %v422
    %v455 = vmul.f32 %v372, %v423
    %v456 = vmul.f32 %v374, %v424
    %v457 = vmul.f32 %v376, %v425
    %v458 = vmul.f32 %v378, %v426
    %v459 = vmul.f32 %v380, %v427
    %v460 = vmul.f32 %v382, %v428
    %v461 = vmul.f32 %v384, %v429
    %v462 = vmul.f32 %v386, %v430
    %v463 = vmul.f32 %v388, %v431
    %v464 = vmul.f32 %v390, %v432
    %v465 = vmul.f32 %v392, %v433
    %v466 = vmul.f32 %v394, %v434
    %v467 = vmul.f32 %v396, %v435
    %v468 = vmul.f32 %v398, %v436
    %v469 = vmul.f32 %v400, %v437
    %v470 = vmul.f32 %v402, %v438
    %v471 = vmul.f32 %v404, %v439
    %v472 = vmul.f32 %v406, %v440
    %v473 = vmul.f32 %v408, %v441
    %v474 = vmul.f32 %v410, %v442
    %vm475 = vcmp.gt.f32.partialorder %v157, 20.0
    %vm476 = vcmp.gt.f32.partialorder %v162, 20.0
    %vm477 = vcmp.gt.f32.partialorder %v167, 20.0
    %vm478 = vcmp.gt.f32.partialorder %v172, 20.0
    %vm479 = vcmp.gt.f32.partialorder %v177, 20.0
    %vm480 = vcmp.gt.f32.partialorder %v182, 20.0
    %vm481 = vcmp.gt.f32.partialorder %v187, 20.0
    %vm482 = vcmp.gt.f32.partialorder %v192, 20.0
    %vm483 = vcmp.gt.f32.partialorder %v197, 20.0
    %vm484 = vcmp.gt.f32.partialorder %v202, 20.0
    %vm485 = vcmp.gt.f32.partialorder %v207, 20.0
    %vm486 = vcmp.gt.f32.partialorder %v212, 20.0
    %vm487 = vcmp.gt.f32.partialorder %v217, 20.0
    %vm488 = vcmp.gt.f32.partialorder %v222, 20.0
    %vm489 = vcmp.gt.f32.partialorder %v227, 20.0
    %vm490 = vcmp.gt.f32.partialorder %v232, 20.0
    %vm491 = vcmp.gt.f32.partialorder %v237, 20.0
    %vm492 = vcmp.gt.f32.partialorder %v242, 20.0
    %vm493 = vcmp.gt.f32.partialorder %v247, 20.0
    %vm494 = vcmp.gt.f32.partialorder %v252, 20.0
    %vm495 = vcmp.gt.f32.partialorder %v257, 20.0
    %vm496 = vcmp.gt.f32.partialorder %v262, 20.0
    %vm497 = vcmp.gt.f32.partialorder %v267, 20.0
    %vm498 = vcmp.gt.f32.partialorder %v272, 20.0
    %vm499 = vcmp.gt.f32.partialorder %v277, 20.0
    %vm500 = vcmp.gt.f32.partialorder %v282, 20.0
    %vm501 = vcmp.gt.f32.partialorder %v287, 20.0
    %vm502 = vcmp.gt.f32.partialorder %v292, 20.0
    %vm503 = vcmp.gt.f32.partialorder %v297, 20.0
    %vm504 = vcmp.gt.f32.partialorder %v302, 20.0
    %vm505 = vcmp.gt.f32.partialorder %v307, 20.0
    %vm506 = vcmp.gt.f32.partialorder %v312, 20.0
    %v507 = vmul.f32 %v157, %v443
    %v508 = vmul.f32 %v162, %v444
    %v509 = vmul.f32 %v167, %v445
    %v510 = vmul.f32 %v172, %v446
    %v511 = vmul.f32 %v177, %v447
    %v512 = vmul.f32 %v182, %v448
    %v513 = vmul.f32 %v187, %v449
    %v514 = vmul.f32 %v192, %v450
    %v515 = vmul.f32 %v197, %v451
    %v516 = vmul.f32 %v202, %v452
    %v517 = vmul.f32 %v207, %v453
    %v518 = vmul.f32 %v212, %v454
    %v519 = vmul.f32 %v217, %v455
    %v520 = vmul.f32 %v222, %v456
    %v521 = vmul.f32 %v227, %v457
    %v522 = vmul.f32 %v232, %v458
    %v523 = vmul.f32 %v237, %v459
    %v524 = vmul.f32 %v242, %v460
    %v525 = vmul.f32 %v247, %v461
    %v526 = vmul.f32 %v252, %v462
    %v527 = vmul.f32 %v257, %v463
    %v528 = vmul.f32 %v262, %v464
    %v529 = vmul.f32 %v267, %v465
    %v530 = vmul.f32 %v272, %v466
    %v531 = vmul.f32 %v277, %v467
    %v532 = vmul.f32 %v282, %v468
    %v533 = vmul.f32 %v287, %v469
    %v534 = vmul.f32 %v292, %v470
    %v535 = vmul.f32 %v297, %v471
    %v536 = vmul.f32 %v302, %v472
    %v537 = vmul.f32 %v307, %v473
    %v538 = vmul.f32 %v312, %v474
    %v539 = vadd.f32 %v443, 2.0
    %v540 = vadd.f32 %v444, 2.0
    %v541 = vadd.f32 %v445, 2.0
    %v542 = vadd.f32 %v446, 2.0
    %v543 = vadd.f32 %v447, 2.0
    %v544 = vadd.f32 %v448, 2.0
    %v545 = vadd.f32 %v449, 2.0
    %v546 = vadd.f32 %v450, 2.0
    %v547 = vadd.f32 %v451, 2.0
    %v548 = vadd.f32 %v452, 2.0
    %v549 = vadd.f32 %v453, 2.0
    %v550 = vadd.f32 %v454, 2.0
    %v551 = vadd.f32 %v455, 2.0
    %v552 = vadd.f32 %v456, 2.0
    %v553 = vadd.f32 %v457, 2.0
    %v554 = vadd.f32 %v458, 2.0
    %v555 = vadd.f32 %v459, 2.0
    %v556 = vadd.f32 %v460, 2.0
    %v557 = vadd.f32 %v461, 2.0
    %v558 = vadd.f32 %v462, 2.0
    %v559 = vadd.f32 %v463, 2.0
    %v560 = vadd.f32 %v464, 2.0
    %v561 = vadd.f32 %v465, 2.0
    %v562 = vadd.f32 %v466, 2.0
    %v563 = vadd.f32 %v467, 2.0
    %v564 = vadd.f32 %v468, 2.0
    %v565 = vadd.f32 %v469, 2.0
    %v566 = vadd.f32 %v470, 2.0
    %v567 = vadd.f32 %v471, 2.0
    %v568 = vadd.f32 %v472, 2.0
    %v569 = vadd.f32 %v473, 2.0
    %v570 = vadd.f32 %v474, 2.0
    %v571 = vrcp.pop %v539
    %v572 = vrcp.pop %v540
    %v573 = vrcp.pop %v541
    %v574 = vrcp.pop %v542
    %v575 = vrcp.pop %v543
    %v576 = vrcp.pop %v544
    %v577 = vrcp.pop %v545
    %v578 = vrcp.pop %v546
    %v579 = vrcp.pop %v547
    %v580 = vrcp.pop %v548
    %v581 = vrcp.pop %v549
    %v582 = vrcp.pop %v550
    %v583 = vrcp.pop %v551
    %v584 = vrcp.pop %v552
    %v585 = vrcp.pop %v553
    %v586 = vrcp.pop %v554
    %v587 = vrcp.pop %v555
    %v588 = vrcp.pop %v556
    %v589 = vrcp.pop %v557
    %v590 = vrcp.pop %v558
    %v591 = vrcp.pop %v559
    %v592 = vrcp.pop %v560
    %v593 = vrcp.pop %v561
    %v594 = vrcp.pop %v562
    %v595 = vrcp.pop %v563
    %v596 = vrcp.pop %v564
    %v597 = vrcp.pop %v565
    %v598 = vrcp.pop %v566
    %v599 = vrcp.pop %v567
    %v600 = vrcp.pop %v568
    %v601 = vrcp.pop %v569
    %v602 = vrcp.pop %v570
    %v603 = vmul.f32 %v507, %v571
    %v604 = vmul.f32 %v508, %v572
    %v605 = vmul.f32 %v509, %v573
    %v606 = vmul.f32 %v510, %v574
    %v607 = vmul.f32 %v511, %v575
    %v608 = vmul.f32 %v512, %v576
    %v609 = vmul.f32 %v513, %v577
    %v610 = vmul.f32 %v514, %v578
    %v611 = vmul.f32 %v515, %v579
    %v612 = vmul.f32 %v516, %v580
    %v613 = vmul.f32 %v517, %v581
    %v614 = vmul.f32 %v518, %v582
    %v615 = vmul.f32 %v519, %v583
    %v616 = vmul.f32 %v520, %v584
    %v617 = vmul.f32 %v521, %v585
    %v618 = vmul.f32 %v522, %v586
    %v619 = vmul.f32 %v523, %v587
    %v620 = vmul.f32 %v524, %v588
    %v621 = vmul.f32 %v525, %v589
    %v622 = vmul.f32 %v526, %v590
    %v623 = vmul.f32 %v527, %v591
    %v624 = vmul.f32 %v528, %v592
    %v625 = vmul.f32 %v529, %v593
    %v626 = vmul.f32 %v530, %v594
    %v627 = vmul.f32 %v531, %v595
    %v628 = vmul.f32 %v532, %v596
    %v629 = vmul.f32 %v533, %v597
    %v630 = vmul.f32 %v534, %v598
    %v631 = vmul.f32 %v535, %v599
    %v632 = vmul.f32 %v536, %v600
    %v633 = vmul.f32 %v537, %v601
    %v634 = vmul.f32 %v538, %v602
    %v635 = vsel %vm475, %v157, %v603
    %v636 = vsel %vm476, %v162, %v604
    %v637 = vsel %vm477, %v167, %v605
    %v638 = vsel %vm478, %v172, %v606
    %v639 = vsel %vm479, %v177, %v607
    %v640 = vsel %vm480, %v182, %v608
    %v641 = vsel %vm481, %v187, %v609
    %v642 = vsel %vm482, %v192, %v610
    %v643 = vsel %vm483, %v197, %v611
    %v644 = vsel %vm484, %v202, %v612
    %v645 = vsel %vm485, %v207, %v613
    %v646 = vsel %vm486, %v212, %v614
    %v647 = vsel %vm487, %v217, %v615
    %v648 = vsel %vm488, %v222, %v616
    %v649 = vsel %vm489, %v227, %v617
    %v650 = vsel %vm490, %v232, %v618
    %v651 = vsel %vm491, %v237, %v619
    %v652 = vsel %vm492, %v242, %v620
    %v653 = vsel %vm493, %v247, %v621
    %v654 = vsel %vm494, %v252, %v622
    %v655 = vsel %vm495, %v257, %v623
    %v656 = vsel %vm496, %v262, %v624
    %v657 = vsel %vm497, %v267, %v625
    %v658 = vsel %vm498, %v272, %v626
    %v659 = vsel %vm499, %v277, %v627
    %v660 = vsel %vm500, %v282, %v628
    %v661 = vsel %vm501, %v287, %v629
    %v662 = vsel %vm502, %v292, %v630
    %v663 = vsel %vm503, %v297, %v631
    %v664 = vsel %vm504, %v302, %v632
    %v665 = vsel %vm505, %v307, %v633
    %v666 = vsel %vm506, %v312, %v634
    %v667 = vld [vmem:[%s4] sm:$0x1]
    %v669 = vlaneseq
    %v670 = vshrl.u32 %v669, 7
    %v671 = vsub.s32 0, %v670
    %v672 = vrot.slane %v667, %v671
    %v674 = vmul.f32 %v635, %v672
    %v675 = vmul.f32 %v636, %v672
    %v676 = vmul.f32 %v637, %v672
    %v677 = vmul.f32 %v638, %v672
    %v678 = vmul.f32 %v639, %v672
    %v679 = vmul.f32 %v640, %v672
    %v680 = vmul.f32 %v641, %v672
    %v681 = vmul.f32 %v642, %v672
    %v682 = vmul.f32 %v643, %v672
    %v683 = vmul.f32 %v644, %v672
    %v684 = vmul.f32 %v645, %v672
    %v685 = vmul.f32 %v646, %v672
    %v686 = vmul.f32 %v647, %v672
    %v687 = vmul.f32 %v648, %v672
    %v688 = vmul.f32 %v649, %v672
    %v689 = vmul.f32 %v650, %v672
    %v690 = vmul.f32 %v651, %v672
    %v691 = vmul.f32 %v652, %v672
    %v692 = vmul.f32 %v653, %v672
    %v693 = vmul.f32 %v654, %v672
    %v694 = vmul.f32 %v655, %v672
    %v695 = vmul.f32 %v656, %v672
    %v696 = vmul.f32 %v657, %v672
    %v697 = vmul.f32 %v658, %v672
    %v698 = vmul.f32 %v659, %v672
    %v699 = vmul.f32 %v660, %v672
    %v700 = vmul.f32 %v661, %v672
    %v701 = vmul.f32 %v662, %v672
    %v702 = vmul.f32 %v663, %v672
    %v703 = vmul.f32 %v664, %v672
    %v704 = vmul.f32 %v665, %v672
    %v705 = vmul.f32 %v666, %v672
    %706 = vadd.xlane.f32.xlu0 %v674
    %v707 = vpop.xlane.xlu0 %706
    %708 = vadd.xlane.f32.xlu0 %v675
    %v709 = vpop.xlane.xlu0 %708
    %710 = vadd.xlane.f32.xlu0 %v676
    %v711 = vpop.xlane.xlu0 %710
    %712 = vadd.xlane.f32.xlu0 %v677
    %v713 = vpop.xlane.xlu0 %712
    %714 = vadd.xlane.f32.xlu0 %v678
    %v715 = vpop.xlane.xlu0 %714
    %716 = vadd.xlane.f32.xlu0 %v679
    %v717 = vpop.xlane.xlu0 %716
    %718 = vadd.xlane.f32.xlu0 %v680
    %v719 = vpop.xlane.xlu0 %718
    %720 = vadd.xlane.f32.xlu0 %v681
    %v721 = vpop.xlane.xlu0 %720
    %722 = vadd.xlane.f32.xlu0 %v682
    %v723 = vpop.xlane.xlu0 %722
    %724 = vadd.xlane.f32.xlu0 %v683
    %v725 = vpop.xlane.xlu0 %724
    %726 = vadd.xlane.f32.xlu0 %v684
    %v727 = vpop.xlane.xlu0 %726
    %728 = vadd.xlane.f32.xlu0 %v685
    %v729 = vpop.xlane.xlu0 %728
    %730 = vadd.xlane.f32.xlu0 %v686
    %v731 = vpop.xlane.xlu0 %730
    %732 = vadd.xlane.f32.xlu0 %v687
    %v733 = vpop.xlane.xlu0 %732
    %734 = vadd.xlane.f32.xlu0 %v688
    %v735 = vpop.xlane.xlu0 %734
    %736 = vadd.xlane.f32.xlu0 %v689
    %v737 = vpop.xlane.xlu0 %736
    %738 = vadd.xlane.f32.xlu0 %v690
    %v739 = vpop.xlane.xlu0 %738
    %740 = vadd.xlane.f32.xlu0 %v691
    %v741 = vpop.xlane.xlu0 %740
    %742 = vadd.xlane.f32.xlu0 %v692
    %v743 = vpop.xlane.xlu0 %742
    %744 = vadd.xlane.f32.xlu0 %v693
    %v745 = vpop.xlane.xlu0 %744
    %746 = vadd.xlane.f32.xlu0 %v694
    %v747 = vpop.xlane.xlu0 %746
    %748 = vadd.xlane.f32.xlu0 %v695
    %v749 = vpop.xlane.xlu0 %748
    %750 = vadd.xlane.f32.xlu0 %v696
    %v751 = vpop.xlane.xlu0 %750
    %752 = vadd.xlane.f32.xlu0 %v697
    %v753 = vpop.xlane.xlu0 %752
    %754 = vadd.xlane.f32.xlu0 %v698
    %v755 = vpop.xlane.xlu0 %754
    %756 = vadd.xlane.f32.xlu0 %v699
    %v757 = vpop.xlane.xlu0 %756
    %758 = vadd.xlane.f32.xlu0 %v700
    %v759 = vpop.xlane.xlu0 %758
    %760 = vadd.xlane.f32.xlu0 %v701
    %v761 = vpop.xlane.xlu0 %760
    %762 = vadd.xlane.f32.xlu0 %v702
    %v763 = vpop.xlane.xlu0 %762
    %764 = vadd.xlane.f32.xlu0 %v703
    %v765 = vpop.xlane.xlu0 %764
    %766 = vadd.xlane.f32.xlu0 %v704
    %v767 = vpop.xlane.xlu0 %766
    %768 = vadd.xlane.f32.xlu0 %v705
    %v769 = vpop.xlane.xlu0 %768
    %v770 = vld [vmem:[%s1] sm:$0xff]
    %v771 = vld [vmem:[%s1 + $0x8] sm:$0xff]
    %v772 = vld [vmem:[%s1 + $0x10] sm:$0xff]
    %v773 = vld [vmem:[%s1 + $0x18] sm:$0xff]
    %v774 = vld [vmem:[%s1 + $0x20] sm:$0xff]
    %v775 = vld [vmem:[%s1 + $0x28] sm:$0xff]
    %v776 = vld [vmem:[%s1 + $0x30] sm:$0xff]
    %v777 = vld [vmem:[%s1 + $0x38] sm:$0xff]
    %v778 = vld [vmem:[%s1 + $0x40] sm:$0xff]
    %v779 = vld [vmem:[%s1 + $0x48] sm:$0xff]
    %v780 = vld [vmem:[%s1 + $0x50] sm:$0xff]
    %v781 = vld [vmem:[%s1 + $0x58] sm:$0xff]
    %v782 = vld [vmem:[%s1 + $0x60] sm:$0xff]
    %v783 = vld [vmem:[%s1 + $0x68] sm:$0xff]
    %v784 = vld [vmem:[%s1 + $0x70] sm:$0xff]
    %v785 = vld [vmem:[%s1 + $0x78] sm:$0xff]
    %v786 = vld [vmem:[%s1 + $0x80] sm:$0xff]
    %v787 = vld [vmem:[%s1 + $0x88] sm:$0xff]
    %v788 = vld [vmem:[%s1 + $0x90] sm:$0xff]
    %v789 = vld [vmem:[%s1 + $0x98] sm:$0xff]
    %v790 = vld [vmem:[%s1 + $0xa0] sm:$0xff]
    %v791 = vld [vmem:[%s1 + $0xa8] sm:$0xff]
    %v792 = vld [vmem:[%s1 + $0xb0] sm:$0xff]
    %v793 = vld [vmem:[%s1 + $0xb8] sm:$0xff]
    %v794 = vld [vmem:[%s1 + $0xc0] sm:$0xff]
    %v795 = vld [vmem:[%s1 + $0xc8] sm:$0xff]
    %v796 = vld [vmem:[%s1 + $0xd0] sm:$0xff]
    %v797 = vld [vmem:[%s1 + $0xd8] sm:$0xff]
    %v798 = vld [vmem:[%s1 + $0xe0] sm:$0xff]
    %v799 = vld [vmem:[%s1 + $0xe8] sm:$0xff]
    %v800 = vld [vmem:[%s1 + $0xf0] sm:$0xff]
    %v801 = vld [vmem:[%s1 + $0xf8] sm:$0xff]
    %v802 = vmul.f32 %v770, -100000.0
    %v803 = vmul.f32 %v771, -100000.0
    %v804 = vmul.f32 %v772, -100000.0
    %v805 = vmul.f32 %v773, -100000.0
    %v806 = vmul.f32 %v774, -100000.0
    %v807 = vmul.f32 %v775, -100000.0
    %v808 = vmul.f32 %v776, -100000.0
    %v809 = vmul.f32 %v777, -100000.0
    %v810 = vmul.f32 %v778, -100000.0
    %v811 = vmul.f32 %v779, -100000.0
    %v812 = vmul.f32 %v780, -100000.0
    %v813 = vmul.f32 %v781, -100000.0
    %v814 = vmul.f32 %v782, -100000.0
    %v815 = vmul.f32 %v783, -100000.0
    %v816 = vmul.f32 %v784, -100000.0
    %v817 = vmul.f32 %v785, -100000.0
    %v818 = vmul.f32 %v786, -100000.0
    %v819 = vmul.f32 %v787, -100000.0
    %v820 = vmul.f32 %v788, -100000.0
    %v821 = vmul.f32 %v789, -100000.0
    %v822 = vmul.f32 %v790, -100000.0
    %v823 = vmul.f32 %v791, -100000.0
    %v824 = vmul.f32 %v792, -100000.0
    %v825 = vmul.f32 %v793, -100000.0
    %v826 = vmul.f32 %v794, -100000.0
    %v827 = vmul.f32 %v795, -100000.0
    %v828 = vmul.f32 %v796, -100000.0
    %v829 = vmul.f32 %v797, -100000.0
    %v830 = vmul.f32 %v798, -100000.0
    %v831 = vmul.f32 %v799, -100000.0
    %v832 = vmul.f32 %v800, -100000.0
    %v833 = vmul.f32 %v801, -100000.0
    %v834 = vadd.f32 %v707, %v802
    %v835 = vadd.f32 %v709, %v803
    %v836 = vadd.f32 %v711, %v804
    %v837 = vadd.f32 %v713, %v805
    %v838 = vadd.f32 %v715, %v806
    %v839 = vadd.f32 %v717, %v807
    %v840 = vadd.f32 %v719, %v808
    %v841 = vadd.f32 %v721, %v809
    %v842 = vadd.f32 %v723, %v810
    %v843 = vadd.f32 %v725, %v811
    %v844 = vadd.f32 %v727, %v812
    %v845 = vadd.f32 %v729, %v813
    %v846 = vadd.f32 %v731, %v814
    %v847 = vadd.f32 %v733, %v815
    %v848 = vadd.f32 %v735, %v816
    %v849 = vadd.f32 %v737, %v817
    %v850 = vadd.f32 %v739, %v818
    %v851 = vadd.f32 %v741, %v819
    %v852 = vadd.f32 %v743, %v820
    %v853 = vadd.f32 %v745, %v821
    %v854 = vadd.f32 %v747, %v822
    %v855 = vadd.f32 %v749, %v823
    %v856 = vadd.f32 %v751, %v824
    %v857 = vadd.f32 %v753, %v825
    %v858 = vadd.f32 %v755, %v826
    %v859 = vadd.f32 %v757, %v827
    %v860 = vadd.f32 %v759, %v828
    %v861 = vadd.f32 %v761, %v829
    %v862 = vadd.f32 %v763, %v830
    %v863 = vadd.f32 %v765, %v831
    %v864 = vadd.f32 %v767, %v832
    %v865 = vadd.f32 %v769, %v833
    %vm866 = vcmask 7168
    %v867 = vsel %vm866, %v834, -inf
    %v868 = vrot.slane %v867, 4
    %v869 = vmax.f32 %v867, %v868
    %v870 = vrot.slane %v869, 2
    %v871 = vmax.f32 %v869, %v870
    %v872 = vrot.slane %v871, 1
    %v873 = vmax.f32 %v871, %v872
    %v874 = vsel %vm866, %v835, -inf
    %v875 = vrot.slane %v874, 4
    %v876 = vmax.f32 %v874, %v875
    %v877 = vrot.slane %v876, 2
    %v878 = vmax.f32 %v876, %v877
    %v879 = vrot.slane %v878, 1
    %v880 = vmax.f32 %v878, %v879
    %v881 = vsel %vm866, %v836, -inf
    %v882 = vrot.slane %v881, 4
    %v883 = vmax.f32 %v881, %v882
    %v884 = vrot.slane %v883, 2
    %v885 = vmax.f32 %v883, %v884
    %v886 = vrot.slane %v885, 1
    %v887 = vmax.f32 %v885, %v886
    %v888 = vsel %vm866, %v837, -inf
    %v889 = vrot.slane %v888, 4
    %v890 = vmax.f32 %v888, %v889
    %v891 = vrot.slane %v890, 2
    %v892 = vmax.f32 %v890, %v891
    %v893 = vrot.slane %v892, 1
    %v894 = vmax.f32 %v892, %v893
    %v895 = vsel %vm866, %v838, -inf
    %v896 = vrot.slane %v895, 4
    %v897 = vmax.f32 %v895, %v896
    %v898 = vrot.slane %v897, 2
    %v899 = vmax.f32 %v897, %v898
    %v900 = vrot.slane %v899, 1
    %v901 = vmax.f32 %v899, %v900
    %v902 = vsel %vm866, %v839, -inf
    %v903 = vrot.slane %v902, 4
    %v904 = vmax.f32 %v902, %v903
    %v905 = vrot.slane %v904, 2
    %v906 = vmax.f32 %v904, %v905
    %v907 = vrot.slane %v906, 1
    %v908 = vmax.f32 %v906, %v907
    %v909 = vsel %vm866, %v840, -inf
    %v910 = vrot.slane %v909, 4
    %v911 = vmax.f32 %v909, %v910
    %v912 = vrot.slane %v911, 2
    %v913 = vmax.f32 %v911, %v912
    %v914 = vrot.slane %v913, 1
    %v915 = vmax.f32 %v913, %v914
    %v916 = vsel %vm866, %v841, -inf
    %v917 = vrot.slane %v916, 4
    %v918 = vmax.f32 %v916, %v917
    %v919 = vrot.slane %v918, 2
    %v920 = vmax.f32 %v918, %v919
    %v921 = vrot.slane %v920, 1
    %v922 = vmax.f32 %v920, %v921
    %v923 = vsel %vm866, %v842, -inf
    %v924 = vrot.slane %v923, 4
    %v925 = vmax.f32 %v923, %v924
    %v926 = vrot.slane %v925, 2
    %v927 = vmax.f32 %v925, %v926
    %v928 = vrot.slane %v927, 1
    %v929 = vmax.f32 %v927, %v928
    %v930 = vsel %vm866, %v843, -inf
    %v931 = vrot.slane %v930, 4
    %v932 = vmax.f32 %v930, %v931
    %v933 = vrot.slane %v932, 2
    %v934 = vmax.f32 %v932, %v933
    %v935 = vrot.slane %v934, 1
    %v936 = vmax.f32 %v934, %v935
    %v937 = vsel %vm866, %v844, -inf
    %v938 = vrot.slane %v937, 4
    %v939 = vmax.f32 %v937, %v938
    %v940 = vrot.slane %v939, 2
    %v941 = vmax.f32 %v939, %v940
    %v942 = vrot.slane %v941, 1
    %v943 = vmax.f32 %v941, %v942
    %v944 = vsel %vm866, %v845, -inf
    %v945 = vrot.slane %v944, 4
    %v946 = vmax.f32 %v944, %v945
    %v947 = vrot.slane %v946, 2
    %v948 = vmax.f32 %v946, %v947
    %v949 = vrot.slane %v948, 1
    %v950 = vmax.f32 %v948, %v949
    %v951 = vsel %vm866, %v846, -inf
    %v952 = vrot.slane %v951, 4
    %v953 = vmax.f32 %v951, %v952
    %v954 = vrot.slane %v953, 2
    %v955 = vmax.f32 %v953, %v954
    %v956 = vrot.slane %v955, 1
    %v957 = vmax.f32 %v955, %v956
    %v958 = vsel %vm866, %v847, -inf
    %v959 = vrot.slane %v958, 4
    %v960 = vmax.f32 %v958, %v959
    %v961 = vrot.slane %v960, 2
    %v962 = vmax.f32 %v960, %v961
    %v963 = vrot.slane %v962, 1
    %v964 = vmax.f32 %v962, %v963
    %v965 = vsel %vm866, %v848, -inf
    %v966 = vrot.slane %v965, 4
    %v967 = vmax.f32 %v965, %v966
    %v968 = vrot.slane %v967, 2
    %v969 = vmax.f32 %v967, %v968
    %v970 = vrot.slane %v969, 1
    %v971 = vmax.f32 %v969, %v970
    %v972 = vsel %vm866, %v849, -inf
    %v973 = vrot.slane %v972, 4
    %v974 = vmax.f32 %v972, %v973
    %v975 = vrot.slane %v974, 2
    %v976 = vmax.f32 %v974, %v975
    %v977 = vrot.slane %v976, 1
    %v978 = vmax.f32 %v976, %v977
    %v979 = vsel %vm866, %v850, -inf
    %v980 = vrot.slane %v979, 4
    %v981 = vmax.f32 %v979, %v980
    %v982 = vrot.slane %v981, 2
    %v983 = vmax.f32 %v981, %v982
    %v984 = vrot.slane %v983, 1
    %v985 = vmax.f32 %v983, %v984
    %v986 = vsel %vm866, %v851, -inf
    %v987 = vrot.slane %v986, 4
    %v988 = vmax.f32 %v986, %v987
    %v989 = vrot.slane %v988, 2
    %v990 = vmax.f32 %v988, %v989
    %v991 = vrot.slane %v990, 1
    %v992 = vmax.f32 %v990, %v991
    %v993 = vsel %vm866, %v852, -inf
    %v994 = vrot.slane %v993, 4
    %v995 = vmax.f32 %v993, %v994
    %v996 = vrot.slane %v995, 2
    %v997 = vmax.f32 %v995, %v996
    %v998 = vrot.slane %v997, 1
    %v999 = vmax.f32 %v997, %v998
    %v1000 = vsel %vm866, %v853, -inf
    %v1001 = vrot.slane %v1000, 4
    %v1002 = vmax.f32 %v1000, %v1001
    %v1003 = vrot.slane %v1002, 2
    %v1004 = vmax.f32 %v1002, %v1003
    %v1005 = vrot.slane %v1004, 1
    %v1006 = vmax.f32 %v1004, %v1005
    %v1007 = vsel %vm866, %v854, -inf
    %v1008 = vrot.slane %v1007, 4
    %v1009 = vmax.f32 %v1007, %v1008
    %v1010 = vrot.slane %v1009, 2
    %v1011 = vmax.f32 %v1009, %v1010
    %v1012 = vrot.slane %v1011, 1
    %v1013 = vmax.f32 %v1011, %v1012
    %v1014 = vsel %vm866, %v855, -inf
    %v1015 = vrot.slane %v1014, 4
    %v1016 = vmax.f32 %v1014, %v1015
    %v1017 = vrot.slane %v1016, 2
    %v1018 = vmax.f32 %v1016, %v1017
    %v1019 = vrot.slane %v1018, 1
    %v1020 = vmax.f32 %v1018, %v1019
    %v1021 = vsel %vm866, %v856, -inf
    %v1022 = vrot.slane %v1021, 4
    %v1023 = vmax.f32 %v1021, %v1022
    %v1024 = vrot.slane %v1023, 2
    %v1025 = vmax.f32 %v1023, %v1024
    %v1026 = vrot.slane %v1025, 1
    %v1027 = vmax.f32 %v1025, %v1026
    %v1028 = vsel %vm866, %v857, -inf
    %v1029 = vrot.slane %v1028, 4
    %v1030 = vmax.f32 %v1028, %v1029
    %v1031 = vrot.slane %v1030, 2
    %v1032 = vmax.f32 %v1030, %v1031
    %v1033 = vrot.slane %v1032, 1
    %v1034 = vmax.f32 %v1032, %v1033
    %v1035 = vsel %vm866, %v858, -inf
    %v1036 = vrot.slane %v1035, 4
    %v1037 = vmax.f32 %v1035, %v1036
    %v1038 = vrot.slane %v1037, 2
    %v1039 = vmax.f32 %v1037, %v1038
    %v1040 = vrot.slane %v1039, 1
    %v1041 = vmax.f32 %v1039, %v1040
    %v1042 = vsel %vm866, %v859, -inf
    %v1043 = vrot.slane %v1042, 4
    %v1044 = vmax.f32 %v1042, %v1043
    %v1045 = vrot.slane %v1044, 2
    %v1046 = vmax.f32 %v1044, %v1045
    %v1047 = vrot.slane %v1046, 1
    %v1048 = vmax.f32 %v1046, %v1047
    %v1049 = vsel %vm866, %v860, -inf
    %v1050 = vrot.slane %v1049, 4
    %v1051 = vmax.f32 %v1049, %v1050
    %v1052 = vrot.slane %v1051, 2
    %v1053 = vmax.f32 %v1051, %v1052
    %v1054 = vrot.slane %v1053, 1
    %v1055 = vmax.f32 %v1053, %v1054
    %v1056 = vsel %vm866, %v861, -inf
    %v1057 = vrot.slane %v1056, 4
    %v1058 = vmax.f32 %v1056, %v1057
    %v1059 = vrot.slane %v1058, 2
    %v1060 = vmax.f32 %v1058, %v1059
    %v1061 = vrot.slane %v1060, 1
    %v1062 = vmax.f32 %v1060, %v1061
    %v1063 = vsel %vm866, %v862, -inf
    %v1064 = vrot.slane %v1063, 4
    %v1065 = vmax.f32 %v1063, %v1064
    %v1066 = vrot.slane %v1065, 2
    %v1067 = vmax.f32 %v1065, %v1066
    %v1068 = vrot.slane %v1067, 1
    %v1069 = vmax.f32 %v1067, %v1068
    %v1070 = vsel %vm866, %v863, -inf
    %v1071 = vrot.slane %v1070, 4
    %v1072 = vmax.f32 %v1070, %v1071
    %v1073 = vrot.slane %v1072, 2
    %v1074 = vmax.f32 %v1072, %v1073
    %v1075 = vrot.slane %v1074, 1
    %v1076 = vmax.f32 %v1074, %v1075
    %v1077 = vsel %vm866, %v864, -inf
    %v1078 = vrot.slane %v1077, 4
    %v1079 = vmax.f32 %v1077, %v1078
    %v1080 = vrot.slane %v1079, 2
    %v1081 = vmax.f32 %v1079, %v1080
    %v1082 = vrot.slane %v1081, 1
    %v1083 = vmax.f32 %v1081, %v1082
    %v1084 = vsel %vm866, %v865, -inf
    %v1085 = vrot.slane %v1084, 4
    %v1086 = vmax.f32 %v1084, %v1085
    %v1087 = vrot.slane %v1086, 2
    %v1088 = vmax.f32 %v1086, %v1087
    %v1089 = vrot.slane %v1088, 1
    %v1090 = vmax.f32 %v1088, %v1089
    %v1091 = vsub.f32 %v834, %v873
    %v1092 = vsub.f32 %v835, %v880
    %v1093 = vsub.f32 %v836, %v887
    %v1094 = vsub.f32 %v837, %v894
    %v1095 = vsub.f32 %v838, %v901
    %v1096 = vsub.f32 %v839, %v908
    %v1097 = vsub.f32 %v840, %v915
    %v1098 = vsub.f32 %v841, %v922
    %v1099 = vsub.f32 %v842, %v929
    %v1100 = vsub.f32 %v843, %v936
    %v1101 = vsub.f32 %v844, %v943
    %v1102 = vsub.f32 %v845, %v950
    %v1103 = vsub.f32 %v846, %v957
    %v1104 = vsub.f32 %v847, %v964
    %v1105 = vsub.f32 %v848, %v971
    %v1106 = vsub.f32 %v849, %v978
    %v1107 = vsub.f32 %v850, %v985
    %v1108 = vsub.f32 %v851, %v992
    %v1109 = vsub.f32 %v852, %v999
    %v1110 = vsub.f32 %v853, %v1006
    %v1111 = vsub.f32 %v854, %v1013
    %v1112 = vsub.f32 %v855, %v1020
    %v1113 = vsub.f32 %v856, %v1027
    %v1114 = vsub.f32 %v857, %v1034
    %v1115 = vsub.f32 %v858, %v1041
    %v1116 = vsub.f32 %v859, %v1048
    %v1117 = vsub.f32 %v860, %v1055
    %v1118 = vsub.f32 %v861, %v1062
    %v1119 = vsub.f32 %v862, %v1069
    %v1120 = vsub.f32 %v863, %v1076
    %v1121 = vsub.f32 %v864, %v1083
    %v1122 = vsub.f32 %v865, %v1090
    %v1123 = vmul.f32 %v1091, 1.442695
    %v1124 = vpow.pop %v1123
    %v1125 = vmul.f32 %v1092, 1.442695
    %v1126 = vpow.pop %v1125
    %v1127 = vmul.f32 %v1093, 1.442695
    %v1128 = vpow.pop %v1127
    %v1129 = vmul.f32 %v1094, 1.442695
    %v1130 = vpow.pop %v1129
    %v1131 = vmul.f32 %v1095, 1.442695
    %v1132 = vpow.pop %v1131
    %v1133 = vmul.f32 %v1096, 1.442695
    %v1134 = vpow.pop %v1133
    %v1135 = vmul.f32 %v1097, 1.442695
    %v1136 = vpow.pop %v1135
    %v1137 = vmul.f32 %v1098, 1.442695
    %v1138 = vpow.pop %v1137
    %v1139 = vmul.f32 %v1099, 1.442695
    %v1140 = vpow.pop %v1139
    %v1141 = vmul.f32 %v1100, 1.442695
    %v1142 = vpow.pop %v1141
    %v1143 = vmul.f32 %v1101, 1.442695
    %v1144 = vpow.pop %v1143
    %v1145 = vmul.f32 %v1102, 1.442695
    %v1146 = vpow.pop %v1145
    %v1147 = vmul.f32 %v1103, 1.442695
    %v1148 = vpow.pop %v1147
    %v1149 = vmul.f32 %v1104, 1.442695
    %v1150 = vpow.pop %v1149
    %v1151 = vmul.f32 %v1105, 1.442695
    %v1152 = vpow.pop %v1151
    %v1153 = vmul.f32 %v1106, 1.442695
    %v1154 = vpow.pop %v1153
    %v1155 = vmul.f32 %v1107, 1.442695
    %v1156 = vpow.pop %v1155
    %v1157 = vmul.f32 %v1108, 1.442695
    %v1158 = vpow.pop %v1157
    %v1159 = vmul.f32 %v1109, 1.442695
    %v1160 = vpow.pop %v1159
    %v1161 = vmul.f32 %v1110, 1.442695
    %v1162 = vpow.pop %v1161
    %v1163 = vmul.f32 %v1111, 1.442695
    %v1164 = vpow.pop %v1163
    %v1165 = vmul.f32 %v1112, 1.442695
    %v1166 = vpow.pop %v1165
    %v1167 = vmul.f32 %v1113, 1.442695
    %v1168 = vpow.pop %v1167
    %v1169 = vmul.f32 %v1114, 1.442695
    %v1170 = vpow.pop %v1169
    %v1171 = vmul.f32 %v1115, 1.442695
    %v1172 = vpow.pop %v1171
    %v1173 = vmul.f32 %v1116, 1.442695
    %v1174 = vpow.pop %v1173
    %v1175 = vmul.f32 %v1117, 1.442695
    %v1176 = vpow.pop %v1175
    %v1177 = vmul.f32 %v1118, 1.442695
    %v1178 = vpow.pop %v1177
    %v1179 = vmul.f32 %v1119, 1.442695
    %v1180 = vpow.pop %v1179
    %v1181 = vmul.f32 %v1120, 1.442695
    %v1182 = vpow.pop %v1181
    %v1183 = vmul.f32 %v1121, 1.442695
    %v1184 = vpow.pop %v1183
    %v1185 = vmul.f32 %v1122, 1.442695
    %v1186 = vpow.pop %v1185
    %v1187 = vsel %vm866, %v1124, 0.0
    %v1188 = vrot.slane %v1187, 4
    %v1189 = vadd.f32 %v1187, %v1188
    %v1190 = vrot.slane %v1189, 2
    %v1191 = vadd.f32 %v1189, %v1190
    %v1192 = vrot.slane %v1191, 1
    %v1193 = vadd.f32 %v1191, %v1192
    %v1194 = vsel %vm866, %v1126, 0.0
    %v1195 = vrot.slane %v1194, 4
    %v1196 = vadd.f32 %v1194, %v1195
    %v1197 = vrot.slane %v1196, 2
    %v1198 = vadd.f32 %v1196, %v1197
    %v1199 = vrot.slane %v1198, 1
    %v1200 = vadd.f32 %v1198, %v1199
    %v1201 = vsel %vm866, %v1128, 0.0
    %v1202 = vrot.slane %v1201, 4
    %v1203 = vadd.f32 %v1201, %v1202
    %v1204 = vrot.slane %v1203, 2
    %v1205 = vadd.f32 %v1203, %v1204
    %v1206 = vrot.slane %v1205, 1
    %v1207 = vadd.f32 %v1205, %v1206
    %v1208 = vsel %vm866, %v1130, 0.0
    %v1209 = vrot.slane %v1208, 4
    %v1210 = vadd.f32 %v1208, %v1209
    %v1211 = vrot.slane %v1210, 2
    %v1212 = vadd.f32 %v1210, %v1211
    %v1213 = vrot.slane %v1212, 1
    %v1214 = vadd.f32 %v1212, %v1213
    %v1215 = vsel %vm866, %v1132, 0.0
    %v1216 = vrot.slane %v1215, 4
    %v1217 = vadd.f32 %v1215, %v1216
    %v1218 = vrot.slane %v1217, 2
    %v1219 = vadd.f32 %v1217, %v1218
    %v1220 = vrot.slane %v1219, 1
    %v1221 = vadd.f32 %v1219, %v1220
    %v1222 = vsel %vm866, %v1134, 0.0
    %v1223 = vrot.slane %v1222, 4
    %v1224 = vadd.f32 %v1222, %v1223
    %v1225 = vrot.slane %v1224, 2
    %v1226 = vadd.f32 %v1224, %v1225
    %v1227 = vrot.slane %v1226, 1
    %v1228 = vadd.f32 %v1226, %v1227
    %v1229 = vsel %vm866, %v1136, 0.0
    %v1230 = vrot.slane %v1229, 4
    %v1231 = vadd.f32 %v1229, %v1230
    %v1232 = vrot.slane %v1231, 2
    %v1233 = vadd.f32 %v1231, %v1232
    %v1234 = vrot.slane %v1233, 1
    %v1235 = vadd.f32 %v1233, %v1234
    %v1236 = vsel %vm866, %v1138, 0.0
    %v1237 = vrot.slane %v1236, 4
    %v1238 = vadd.f32 %v1236, %v1237
    %v1239 = vrot.slane %v1238, 2
    %v1240 = vadd.f32 %v1238, %v1239
    %v1241 = vrot.slane %v1240, 1
    %v1242 = vadd.f32 %v1240, %v1241
    %v1243 = vsel %vm866, %v1140, 0.0
    %v1244 = vrot.slane %v1243, 4
    %v1245 = vadd.f32 %v1243, %v1244
    %v1246 = vrot.slane %v1245, 2
    %v1247 = vadd.f32 %v1245, %v1246
    %v1248 = vrot.slane %v1247, 1
    %v1249 = vadd.f32 %v1247, %v1248
    %v1250 = vsel %vm866, %v1142, 0.0
    %v1251 = vrot.slane %v1250, 4
    %v1252 = vadd.f32 %v1250, %v1251
    %v1253 = vrot.slane %v1252, 2
    %v1254 = vadd.f32 %v1252, %v1253
    %v1255 = vrot.slane %v1254, 1
    %v1256 = vadd.f32 %v1254, %v1255
    %v1257 = vsel %vm866, %v1144, 0.0
    %v1258 = vrot.slane %v1257, 4
    %v1259 = vadd.f32 %v1257, %v1258
    %v1260 = vrot.slane %v1259, 2
    %v1261 = vadd.f32 %v1259, %v1260
    %v1262 = vrot.slane %v1261, 1
    %v1263 = vadd.f32 %v1261, %v1262
    %v1264 = vsel %vm866, %v1146, 0.0
    %v1265 = vrot.slane %v1264, 4
    %v1266 = vadd.f32 %v1264, %v1265
    %v1267 = vrot.slane %v1266, 2
    %v1268 = vadd.f32 %v1266, %v1267
    %v1269 = vrot.slane %v1268, 1
    %v1270 = vadd.f32 %v1268, %v1269
    %v1271 = vsel %vm866, %v1148, 0.0
    %v1272 = vrot.slane %v1271, 4
    %v1273 = vadd.f32 %v1271, %v1272
    %v1274 = vrot.slane %v1273, 2
    %v1275 = vadd.f32 %v1273, %v1274
    %v1276 = vrot.slane %v1275, 1
    %v1277 = vadd.f32 %v1275, %v1276
    %v1278 = vsel %vm866, %v1150, 0.0
    %v1279 = vrot.slane %v1278, 4
    %v1280 = vadd.f32 %v1278, %v1279
    %v1281 = vrot.slane %v1280, 2
    %v1282 = vadd.f32 %v1280, %v1281
    %v1283 = vrot.slane %v1282, 1
    %v1284 = vadd.f32 %v1282, %v1283
    %v1285 = vsel %vm866, %v1152, 0.0
    %v1286 = vrot.slane %v1285, 4
    %v1287 = vadd.f32 %v1285, %v1286
    %v1288 = vrot.slane %v1287, 2
    %v1289 = vadd.f32 %v1287, %v1288
    %v1290 = vrot.slane %v1289, 1
    %v1291 = vadd.f32 %v1289, %v1290
    %v1292 = vsel %vm866, %v1154, 0.0
    %v1293 = vrot.slane %v1292, 4
    %v1294 = vadd.f32 %v1292, %v1293
    %v1295 = vrot.slane %v1294, 2
    %v1296 = vadd.f32 %v1294, %v1295
    %v1297 = vrot.slane %v1296, 1
    %v1298 = vadd.f32 %v1296, %v1297
    %v1299 = vsel %vm866, %v1156, 0.0
    %v1300 = vrot.slane %v1299, 4
    %v1301 = vadd.f32 %v1299, %v1300
    %v1302 = vrot.slane %v1301, 2
    %v1303 = vadd.f32 %v1301, %v1302
    %v1304 = vrot.slane %v1303, 1
    %v1305 = vadd.f32 %v1303, %v1304
    %v1306 = vsel %vm866, %v1158, 0.0
    %v1307 = vrot.slane %v1306, 4
    %v1308 = vadd.f32 %v1306, %v1307
    %v1309 = vrot.slane %v1308, 2
    %v1310 = vadd.f32 %v1308, %v1309
    %v1311 = vrot.slane %v1310, 1
    %v1312 = vadd.f32 %v1310, %v1311
    %v1313 = vsel %vm866, %v1160, 0.0
    %v1314 = vrot.slane %v1313, 4
    %v1315 = vadd.f32 %v1313, %v1314
    %v1316 = vrot.slane %v1315, 2
    %v1317 = vadd.f32 %v1315, %v1316
    %v1318 = vrot.slane %v1317, 1
    %v1319 = vadd.f32 %v1317, %v1318
    %v1320 = vsel %vm866, %v1162, 0.0
    %v1321 = vrot.slane %v1320, 4
    %v1322 = vadd.f32 %v1320, %v1321
    %v1323 = vrot.slane %v1322, 2
    %v1324 = vadd.f32 %v1322, %v1323
    %v1325 = vrot.slane %v1324, 1
    %v1326 = vadd.f32 %v1324, %v1325
    %v1327 = vsel %vm866, %v1164, 0.0
    %v1328 = vrot.slane %v1327, 4
    %v1329 = vadd.f32 %v1327, %v1328
    %v1330 = vrot.slane %v1329, 2
    %v1331 = vadd.f32 %v1329, %v1330
    %v1332 = vrot.slane %v1331, 1
    %v1333 = vadd.f32 %v1331, %v1332
    %v1334 = vsel %vm866, %v1166, 0.0
    %v1335 = vrot.slane %v1334, 4
    %v1336 = vadd.f32 %v1334, %v1335
    %v1337 = vrot.slane %v1336, 2
    %v1338 = vadd.f32 %v1336, %v1337
    %v1339 = vrot.slane %v1338, 1
    %v1340 = vadd.f32 %v1338, %v1339
    %v1341 = vsel %vm866, %v1168, 0.0
    %v1342 = vrot.slane %v1341, 4
    %v1343 = vadd.f32 %v1341, %v1342
    %v1344 = vrot.slane %v1343, 2
    %v1345 = vadd.f32 %v1343, %v1344
    %v1346 = vrot.slane %v1345, 1
    %v1347 = vadd.f32 %v1345, %v1346
    %v1348 = vsel %vm866, %v1170, 0.0
    %v1349 = vrot.slane %v1348, 4
    %v1350 = vadd.f32 %v1348, %v1349
    %v1351 = vrot.slane %v1350, 2
    %v1352 = vadd.f32 %v1350, %v1351
    %v1353 = vrot.slane %v1352, 1
    %v1354 = vadd.f32 %v1352, %v1353
    %v1355 = vsel %vm866, %v1172, 0.0
    %v1356 = vrot.slane %v1355, 4
    %v1357 = vadd.f32 %v1355, %v1356
    %v1358 = vrot.slane %v1357, 2
    %v1359 = vadd.f32 %v1357, %v1358
    %v1360 = vrot.slane %v1359, 1
    %v1361 = vadd.f32 %v1359, %v1360
    %v1362 = vsel %vm866, %v1174, 0.0
    %v1363 = vrot.slane %v1362, 4
    %v1364 = vadd.f32 %v1362, %v1363
    %v1365 = vrot.slane %v1364, 2
    %v1366 = vadd.f32 %v1364, %v1365
    %v1367 = vrot.slane %v1366, 1
    %v1368 = vadd.f32 %v1366, %v1367
    %v1369 = vsel %vm866, %v1176, 0.0
    %v1370 = vrot.slane %v1369, 4
    %v1371 = vadd.f32 %v1369, %v1370
    %v1372 = vrot.slane %v1371, 2
    %v1373 = vadd.f32 %v1371, %v1372
    %v1374 = vrot.slane %v1373, 1
    %v1375 = vadd.f32 %v1373, %v1374
    %v1376 = vsel %vm866, %v1178, 0.0
    %v1377 = vrot.slane %v1376, 4
    %v1378 = vadd.f32 %v1376, %v1377
    %v1379 = vrot.slane %v1378, 2
    %v1380 = vadd.f32 %v1378, %v1379
    %v1381 = vrot.slane %v1380, 1
    %v1382 = vadd.f32 %v1380, %v1381
    %v1383 = vsel %vm866, %v1180, 0.0
    %v1384 = vrot.slane %v1383, 4
    %v1385 = vadd.f32 %v1383, %v1384
    %v1386 = vrot.slane %v1385, 2
    %v1387 = vadd.f32 %v1385, %v1386
    %v1388 = vrot.slane %v1387, 1
    %v1389 = vadd.f32 %v1387, %v1388
    %v1390 = vsel %vm866, %v1182, 0.0
    %v1391 = vrot.slane %v1390, 4
    %v1392 = vadd.f32 %v1390, %v1391
    %v1393 = vrot.slane %v1392, 2
    %v1394 = vadd.f32 %v1392, %v1393
    %v1395 = vrot.slane %v1394, 1
    %v1396 = vadd.f32 %v1394, %v1395
    %v1397 = vsel %vm866, %v1184, 0.0
    %v1398 = vrot.slane %v1397, 4
    %v1399 = vadd.f32 %v1397, %v1398
    %v1400 = vrot.slane %v1399, 2
    %v1401 = vadd.f32 %v1399, %v1400
    %v1402 = vrot.slane %v1401, 1
    %v1403 = vadd.f32 %v1401, %v1402
    %v1404 = vsel %vm866, %v1186, 0.0
    %v1405 = vrot.slane %v1404, 4
    %v1406 = vadd.f32 %v1404, %v1405
    %v1407 = vrot.slane %v1406, 2
    %v1408 = vadd.f32 %v1406, %v1407
    %v1409 = vrot.slane %v1408, 1
    %v1410 = vadd.f32 %v1408, %v1409
    %v1411 = vrcp.pop %v1193
    %v1412 = vmul.f32 %v1124, %v1411
    %v1413 = vrcp.pop %v1200
    %v1414 = vmul.f32 %v1126, %v1413
    %v1415 = vrcp.pop %v1207
    %v1416 = vmul.f32 %v1128, %v1415
    %v1417 = vrcp.pop %v1214
    %v1418 = vmul.f32 %v1130, %v1417
    %v1419 = vrcp.pop %v1221
    %v1420 = vmul.f32 %v1132, %v1419
    %v1421 = vrcp.pop %v1228
    %v1422 = vmul.f32 %v1134, %v1421
    %v1423 = vrcp.pop %v1235
    %v1424 = vmul.f32 %v1136, %v1423
    %v1425 = vrcp.pop %v1242
    %v1426 = vmul.f32 %v1138, %v1425
    %v1427 = vrcp.pop %v1249
    %v1428 = vmul.f32 %v1140, %v1427
    %v1429 = vrcp.pop %v1256
    %v1430 = vmul.f32 %v1142, %v1429
    %v1431 = vrcp.pop %v1263
    %v1432 = vmul.f32 %v1144, %v1431
    %v1433 = vrcp.pop %v1270
    %v1434 = vmul.f32 %v1146, %v1433
    %v1435 = vrcp.pop %v1277
    %v1436 = vmul.f32 %v1148, %v1435
    %v1437 = vrcp.pop %v1284
    %v1438 = vmul.f32 %v1150, %v1437
    %v1439 = vrcp.pop %v1291
    %v1440 = vmul.f32 %v1152, %v1439
    %v1441 = vrcp.pop %v1298
    %v1442 = vmul.f32 %v1154, %v1441
    %v1443 = vrcp.pop %v1305
    %v1444 = vmul.f32 %v1156, %v1443
    %v1445 = vrcp.pop %v1312
    %v1446 = vmul.f32 %v1158, %v1445
    %v1447 = vrcp.pop %v1319
    %v1448 = vmul.f32 %v1160, %v1447
    %v1449 = vrcp.pop %v1326
    %v1450 = vmul.f32 %v1162, %v1449
    %v1451 = vrcp.pop %v1333
    %v1452 = vmul.f32 %v1164, %v1451
    %v1453 = vrcp.pop %v1340
    %v1454 = vmul.f32 %v1166, %v1453
    %v1455 = vrcp.pop %v1347
    %v1456 = vmul.f32 %v1168, %v1455
    %v1457 = vrcp.pop %v1354
    %v1458 = vmul.f32 %v1170, %v1457
    %v1459 = vrcp.pop %v1361
    %v1460 = vmul.f32 %v1172, %v1459
    %v1461 = vrcp.pop %v1368
    %v1462 = vmul.f32 %v1174, %v1461
    %v1463 = vrcp.pop %v1375
    %v1464 = vmul.f32 %v1176, %v1463
    %v1465 = vrcp.pop %v1382
    %v1466 = vmul.f32 %v1178, %v1465
    %v1467 = vrcp.pop %v1389
    %v1468 = vmul.f32 %v1180, %v1467
    %v1469 = vrcp.pop %v1396
    %v1470 = vmul.f32 %v1182, %v1469
    %v1471 = vrcp.pop %v1403
    %v1472 = vmul.f32 %v1184, %v1471
    %v1473 = vrcp.pop %v1410
    %v1474 = vmul.f32 %v1186, %v1473
    %1476 = vset.pattern.permute.xlu0 0
    %1477 = vperm.xlu0 %1476, %v1412
    %v1478 = vpop.permute.xlu0 %1477
    %1481 = vset.pattern.permute.xlu0 0
    %1482 = vperm.xlu0 %1481, %v1414
    %v1483 = vpop.permute.xlu0 %1482
    %1486 = vset.pattern.permute.xlu0 0
    %1487 = vperm.xlu0 %1486, %v1416
    %v1488 = vpop.permute.xlu0 %1487
    %1491 = vset.pattern.permute.xlu0 0
    %1492 = vperm.xlu0 %1491, %v1418
    %v1493 = vpop.permute.xlu0 %1492
    %1496 = vset.pattern.permute.xlu0 0
    %1497 = vperm.xlu0 %1496, %v1420
    %v1498 = vpop.permute.xlu0 %1497
    %1501 = vset.pattern.permute.xlu0 0
    %1502 = vperm.xlu0 %1501, %v1422
    %v1503 = vpop.permute.xlu0 %1502
    %1506 = vset.pattern.permute.xlu0 0
    %1507 = vperm.xlu0 %1506, %v1424
    %v1508 = vpop.permute.xlu0 %1507
    %1511 = vset.pattern.permute.xlu0 0
    %1512 = vperm.xlu0 %1511, %v1426
    %v1513 = vpop.permute.xlu0 %1512
    %1516 = vset.pattern.permute.xlu0 0
    %1517 = vperm.xlu0 %1516, %v1428
    %v1518 = vpop.permute.xlu0 %1517
    %1521 = vset.pattern.permute.xlu0 0
    %1522 = vperm.xlu0 %1521, %v1430
    %v1523 = vpop.permute.xlu0 %1522
    %1526 = vset.pattern.permute.xlu0 0
    %1527 = vperm.xlu0 %1526, %v1432
    %v1528 = vpop.permute.xlu0 %1527
    %1531 = vset.pattern.permute.xlu0 0
    %1532 = vperm.xlu0 %1531, %v1434
    %v1533 = vpop.permute.xlu0 %1532
    %1536 = vset.pattern.permute.xlu0 0
    %1537 = vperm.xlu0 %1536, %v1436
    %v1538 = vpop.permute.xlu0 %1537
    %1541 = vset.pattern.permute.xlu0 0
    %1542 = vperm.xlu0 %1541, %v1438
    %v1543 = vpop.permute.xlu0 %1542
    %1546 = vset.pattern.permute.xlu0 0
    %1547 = vperm.xlu0 %1546, %v1440
    %v1548 = vpop.permute.xlu0 %1547
    %1551 = vset.pattern.permute.xlu0 0
    %1552 = vperm.xlu0 %1551, %v1442
    %v1553 = vpop.permute.xlu0 %1552
    %1556 = vset.pattern.permute.xlu0 0
    %1557 = vperm.xlu0 %1556, %v1444
    %v1558 = vpop.permute.xlu0 %1557
    %1561 = vset.pattern.permute.xlu0 0
    %1562 = vperm.xlu0 %1561, %v1446
    %v1563 = vpop.permute.xlu0 %1562
    %1566 = vset.pattern.permute.xlu0 0
    %1567 = vperm.xlu0 %1566, %v1448
    %v1568 = vpop.permute.xlu0 %1567
    %1571 = vset.pattern.permute.xlu0 0
    %1572 = vperm.xlu0 %1571, %v1450
    %v1573 = vpop.permute.xlu0 %1572
    %1576 = vset.pattern.permute.xlu0 0
    %1577 = vperm.xlu0 %1576, %v1452
    %v1578 = vpop.permute.xlu0 %1577
    %1581 = vset.pattern.permute.xlu0 0
    %1582 = vperm.xlu0 %1581, %v1454
    %v1583 = vpop.permute.xlu0 %1582
    %1586 = vset.pattern.permute.xlu0 0
    %1587 = vperm.xlu0 %1586, %v1456
    %v1588 = vpop.permute.xlu0 %1587
    %1591 = vset.pattern.permute.xlu0 0
    %1592 = vperm.xlu0 %1591, %v1458
    %v1593 = vpop.permute.xlu0 %1592
    %1596 = vset.pattern.permute.xlu0 0
    %1597 = vperm.xlu0 %1596, %v1460
    %v1598 = vpop.permute.xlu0 %1597
    %1601 = vset.pattern.permute.xlu0 0
    %1602 = vperm.xlu0 %1601, %v1462
    %v1603 = vpop.permute.xlu0 %1602
    %1606 = vset.pattern.permute.xlu0 0
    %1607 = vperm.xlu0 %1606, %v1464
    %v1608 = vpop.permute.xlu0 %1607
    %1611 = vset.pattern.permute.xlu0 0
    %1612 = vperm.xlu0 %1611, %v1466
    %v1613 = vpop.permute.xlu0 %1612
    %1616 = vset.pattern.permute.xlu0 0
    %1617 = vperm.xlu0 %1616, %v1468
    %v1618 = vpop.permute.xlu0 %1617
    %1621 = vset.pattern.permute.xlu0 0
    %1622 = vperm.xlu0 %1621, %v1470
    %v1623 = vpop.permute.xlu0 %1622
    %1626 = vset.pattern.permute.xlu0 0
    %1627 = vperm.xlu0 %1626, %v1472
    %v1628 = vpop.permute.xlu0 %1627
    %1631 = vset.pattern.permute.xlu0 0
    %1632 = vperm.xlu0 %1631, %v1474
    %v1633 = vpop.permute.xlu0 %1632
    %v1635 = vmul.f32 %v35, %v1478
    %v1636 = vmul.f32 %v36, %v1483
    %v1637 = vmul.f32 %v37, %v1488
    %v1638 = vmul.f32 %v38, %v1493
    %v1639 = vmul.f32 %v39, %v1498
    %v1640 = vmul.f32 %v40, %v1503
    %v1641 = vmul.f32 %v41, %v1508
    %v1642 = vmul.f32 %v42, %v1513
    %v1643 = vmul.f32 %v43, %v1518
    %v1644 = vmul.f32 %v44, %v1523
    %v1645 = vmul.f32 %v45, %v1528
    %v1646 = vmul.f32 %v46, %v1533
    %v1647 = vmul.f32 %v47, %v1538
    %v1648 = vmul.f32 %v48, %v1543
    %v1649 = vmul.f32 %v49, %v1548
    %v1650 = vmul.f32 %v50, %v1553
    %v1651 = vmul.f32 %v51, %v1558
    %v1652 = vmul.f32 %v52, %v1563
    %v1653 = vmul.f32 %v53, %v1568
    %v1654 = vmul.f32 %v54, %v1573
    %v1655 = vmul.f32 %v55, %v1578
    %v1656 = vmul.f32 %v56, %v1583
    %v1657 = vmul.f32 %v57, %v1588
    %v1658 = vmul.f32 %v58, %v1593
    %v1659 = vmul.f32 %v59, %v1598
    %v1660 = vmul.f32 %v60, %v1603
    %v1661 = vmul.f32 %v61, %v1608
    %v1662 = vmul.f32 %v62, %v1613
    %v1663 = vmul.f32 %v63, %v1618
    %v1664 = vmul.f32 %v64, %v1623
    %v1665 = vmul.f32 %v65, %v1628
    %v1666 = vmul.f32 %v66, %v1633
    %v1667 = vrot.slane %v1635, 4
    %v1668 = vadd.f32 %v1635, %v1667
    %v1669 = vrot.slane %v1668, 2
    %v1670 = vadd.f32 %v1668, %v1669
    %v1671 = vrot.slane %v1670, 1
    %v1672 = vadd.f32 %v1670, %v1671
    %v1673 = vrot.slane %v1636, 4
    %v1674 = vadd.f32 %v1636, %v1673
    %v1675 = vrot.slane %v1674, 2
    %v1676 = vadd.f32 %v1674, %v1675
    %v1677 = vrot.slane %v1676, 1
    %v1678 = vadd.f32 %v1676, %v1677
    %v1679 = vrot.slane %v1637, 4
    %v1680 = vadd.f32 %v1637, %v1679
    %v1681 = vrot.slane %v1680, 2
    %v1682 = vadd.f32 %v1680, %v1681
    %v1683 = vrot.slane %v1682, 1
    %v1684 = vadd.f32 %v1682, %v1683
    %v1685 = vrot.slane %v1638, 4
    %v1686 = vadd.f32 %v1638, %v1685
    %v1687 = vrot.slane %v1686, 2
    %v1688 = vadd.f32 %v1686, %v1687
    %v1689 = vrot.slane %v1688, 1
    %v1690 = vadd.f32 %v1688, %v1689
    %v1691 = vrot.slane %v1639, 4
    %v1692 = vadd.f32 %v1639, %v1691
    %v1693 = vrot.slane %v1692, 2
    %v1694 = vadd.f32 %v1692, %v1693
    %v1695 = vrot.slane %v1694, 1
    %v1696 = vadd.f32 %v1694, %v1695
    %v1697 = vrot.slane %v1640, 4
    %v1698 = vadd.f32 %v1640, %v1697
    %v1699 = vrot.slane %v1698, 2
    %v1700 = vadd.f32 %v1698, %v1699
    %v1701 = vrot.slane %v1700, 1
    %v1702 = vadd.f32 %v1700, %v1701
    %v1703 = vrot.slane %v1641, 4
    %v1704 = vadd.f32 %v1641, %v1703
    %v1705 = vrot.slane %v1704, 2
    %v1706 = vadd.f32 %v1704, %v1705
    %v1707 = vrot.slane %v1706, 1
    %v1708 = vadd.f32 %v1706, %v1707
    %v1709 = vrot.slane %v1642, 4
    %v1710 = vadd.f32 %v1642, %v1709
    %v1711 = vrot.slane %v1710, 2
    %v1712 = vadd.f32 %v1710, %v1711
    %v1713 = vrot.slane %v1712, 1
    %v1714 = vadd.f32 %v1712, %v1713
    %v1715 = vrot.slane %v1643, 4
    %v1716 = vadd.f32 %v1643, %v1715
    %v1717 = vrot.slane %v1716, 2
    %v1718 = vadd.f32 %v1716, %v1717
    %v1719 = vrot.slane %v1718, 1
    %v1720 = vadd.f32 %v1718, %v1719
    %v1721 = vrot.slane %v1644, 4
    %v1722 = vadd.f32 %v1644, %v1721
    %v1723 = vrot.slane %v1722, 2
    %v1724 = vadd.f32 %v1722, %v1723
    %v1725 = vrot.slane %v1724, 1
    %v1726 = vadd.f32 %v1724, %v1725
    %v1727 = vrot.slane %v1645, 4
    %v1728 = vadd.f32 %v1645, %v1727
    %v1729 = vrot.slane %v1728, 2
    %v1730 = vadd.f32 %v1728, %v1729
    %v1731 = vrot.slane %v1730, 1
    %v1732 = vadd.f32 %v1730, %v1731
    %v1733 = vrot.slane %v1646, 4
    %v1734 = vadd.f32 %v1646, %v1733
    %v1735 = vrot.slane %v1734, 2
    %v1736 = vadd.f32 %v1734, %v1735
    %v1737 = vrot.slane %v1736, 1
    %v1738 = vadd.f32 %v1736, %v1737
    %v1739 = vrot.slane %v1647, 4
    %v1740 = vadd.f32 %v1647, %v1739
    %v1741 = vrot.slane %v1740, 2
    %v1742 = vadd.f32 %v1740, %v1741
    %v1743 = vrot.slane %v1742, 1
    %v1744 = vadd.f32 %v1742, %v1743
    %v1745 = vrot.slane %v1648, 4
    %v1746 = vadd.f32 %v1648, %v1745
    %v1747 = vrot.slane %v1746, 2
    %v1748 = vadd.f32 %v1746, %v1747
    %v1749 = vrot.slane %v1748, 1
    %v1750 = vadd.f32 %v1748, %v1749
    %v1751 = vrot.slane %v1649, 4
    %v1752 = vadd.f32 %v1649, %v1751
    %v1753 = vrot.slane %v1752, 2
    %v1754 = vadd.f32 %v1752, %v1753
    %v1755 = vrot.slane %v1754, 1
    %v1756 = vadd.f32 %v1754, %v1755
    %v1757 = vrot.slane %v1650, 4
    %v1758 = vadd.f32 %v1650, %v1757
    %v1759 = vrot.slane %v1758, 2
    %v1760 = vadd.f32 %v1758, %v1759
    %v1761 = vrot.slane %v1760, 1
    %v1762 = vadd.f32 %v1760, %v1761
    %v1763 = vrot.slane %v1651, 4
    %v1764 = vadd.f32 %v1651, %v1763
    %v1765 = vrot.slane %v1764, 2
    %v1766 = vadd.f32 %v1764, %v1765
    %v1767 = vrot.slane %v1766, 1
    %v1768 = vadd.f32 %v1766, %v1767
    %v1769 = vrot.slane %v1652, 4
    %v1770 = vadd.f32 %v1652, %v1769
    %v1771 = vrot.slane %v1770, 2
    %v1772 = vadd.f32 %v1770, %v1771
    %v1773 = vrot.slane %v1772, 1
    %v1774 = vadd.f32 %v1772, %v1773
    %v1775 = vrot.slane %v1653, 4
    %v1776 = vadd.f32 %v1653, %v1775
    %v1777 = vrot.slane %v1776, 2
    %v1778 = vadd.f32 %v1776, %v1777
    %v1779 = vrot.slane %v1778, 1
    %v1780 = vadd.f32 %v1778, %v1779
    %v1781 = vrot.slane %v1654, 4
    %v1782 = vadd.f32 %v1654, %v1781
    %v1783 = vrot.slane %v1782, 2
    %v1784 = vadd.f32 %v1782, %v1783
    %v1785 = vrot.slane %v1784, 1
    %v1786 = vadd.f32 %v1784, %v1785
    %v1787 = vrot.slane %v1655, 4
    %v1788 = vadd.f32 %v1655, %v1787
    %v1789 = vrot.slane %v1788, 2
    %v1790 = vadd.f32 %v1788, %v1789
    %v1791 = vrot.slane %v1790, 1
    %v1792 = vadd.f32 %v1790, %v1791
    %v1793 = vrot.slane %v1656, 4
    %v1794 = vadd.f32 %v1656, %v1793
    %v1795 = vrot.slane %v1794, 2
    %v1796 = vadd.f32 %v1794, %v1795
    %v1797 = vrot.slane %v1796, 1
    %v1798 = vadd.f32 %v1796, %v1797
    %v1799 = vrot.slane %v1657, 4
    %v1800 = vadd.f32 %v1657, %v1799
    %v1801 = vrot.slane %v1800, 2
    %v1802 = vadd.f32 %v1800, %v1801
    %v1803 = vrot.slane %v1802, 1
    %v1804 = vadd.f32 %v1802, %v1803
    %v1805 = vrot.slane %v1658, 4
    %v1806 = vadd.f32 %v1658, %v1805
    %v1807 = vrot.slane %v1806, 2
    %v1808 = vadd.f32 %v1806, %v1807
    %v1809 = vrot.slane %v1808, 1
    %v1810 = vadd.f32 %v1808, %v1809
    %v1811 = vrot.slane %v1659, 4
    %v1812 = vadd.f32 %v1659, %v1811
    %v1813 = vrot.slane %v1812, 2
    %v1814 = vadd.f32 %v1812, %v1813
    %v1815 = vrot.slane %v1814, 1
    %v1816 = vadd.f32 %v1814, %v1815
    %v1817 = vrot.slane %v1660, 4
    %v1818 = vadd.f32 %v1660, %v1817
    %v1819 = vrot.slane %v1818, 2
    %v1820 = vadd.f32 %v1818, %v1819
    %v1821 = vrot.slane %v1820, 1
    %v1822 = vadd.f32 %v1820, %v1821
    %v1823 = vrot.slane %v1661, 4
    %v1824 = vadd.f32 %v1661, %v1823
    %v1825 = vrot.slane %v1824, 2
    %v1826 = vadd.f32 %v1824, %v1825
    %v1827 = vrot.slane %v1826, 1
    %v1828 = vadd.f32 %v1826, %v1827
    %v1829 = vrot.slane %v1662, 4
    %v1830 = vadd.f32 %v1662, %v1829
    %v1831 = vrot.slane %v1830, 2
    %v1832 = vadd.f32 %v1830, %v1831
    %v1833 = vrot.slane %v1832, 1
    %v1834 = vadd.f32 %v1832, %v1833
    %v1835 = vrot.slane %v1663, 4
    %v1836 = vadd.f32 %v1663, %v1835
    %v1837 = vrot.slane %v1836, 2
    %v1838 = vadd.f32 %v1836, %v1837
    %v1839 = vrot.slane %v1838, 1
    %v1840 = vadd.f32 %v1838, %v1839
    %v1841 = vrot.slane %v1664, 4
    %v1842 = vadd.f32 %v1664, %v1841
    %v1843 = vrot.slane %v1842, 2
    %v1844 = vadd.f32 %v1842, %v1843
    %v1845 = vrot.slane %v1844, 1
    %v1846 = vadd.f32 %v1844, %v1845
    %v1847 = vrot.slane %v1665, 4
    %v1848 = vadd.f32 %v1665, %v1847
    %v1849 = vrot.slane %v1848, 2
    %v1850 = vadd.f32 %v1848, %v1849
    %v1851 = vrot.slane %v1850, 1
    %v1852 = vadd.f32 %v1850, %v1851
    %v1853 = vrot.slane %v1666, 4
    %v1854 = vadd.f32 %v1666, %v1853
    %v1855 = vrot.slane %v1854, 2
    %v1856 = vadd.f32 %v1854, %v1855
    %v1857 = vrot.slane %v1856, 1
    %v1858 = vadd.f32 %v1856, %v1857
    %vm1891 = vcmask 1041409
    %v1892 = vsel %vm1891, %v1678, %v1672
    %vm1893 = vcmask 1042434
    %v1894 = vsel %vm1893, %v1684, %v1892
    %vm1895 = vcmask 1043459
    %v1896 = vsel %vm1895, %v1690, %v1894
    %vm1897 = vcmask 1044484
    %v1898 = vsel %vm1897, %v1696, %v1896
    %vm1899 = vcmask 1045509
    %v1900 = vsel %vm1899, %v1702, %v1898
    %vm1901 = vcmask 1046534
    %v1902 = vsel %vm1901, %v1708, %v1900
    %vm1903 = vcmask 1047559
    %v1904 = vsel %vm1903, %v1714, %v1902
    %v1905 = vsel %vm1891, %v1726, %v1720
    %v1906 = vsel %vm1893, %v1732, %v1905
    %v1907 = vsel %vm1895, %v1738, %v1906
    %v1908 = vsel %vm1897, %v1744, %v1907
    %v1909 = vsel %vm1899, %v1750, %v1908
    %v1910 = vsel %vm1901, %v1756, %v1909
    %v1911 = vsel %vm1903, %v1762, %v1910
    %v1912 = vsel %vm1891, %v1774, %v1768
    %v1913 = vsel %vm1893, %v1780, %v1912
    %v1914 = vsel %vm1895, %v1786, %v1913
    %v1915 = vsel %vm1897, %v1792, %v1914
    %v1916 = vsel %vm1899, %v1798, %v1915
    %v1917 = vsel %vm1901, %v1804, %v1916
    %v1918 = vsel %vm1903, %v1810, %v1917
    %v1919 = vsel %vm1891, %v1822, %v1816
    %v1920 = vsel %vm1893, %v1828, %v1919
    %v1921 = vsel %vm1895, %v1834, %v1920
    %v1922 = vsel %vm1897, %v1840, %v1921
    %v1923 = vsel %vm1899, %v1846, %v1922
    %v1924 = vsel %vm1901, %v1852, %v1923
    %v1925 = vsel %vm1903, %v1858, %v1924
    %1930 = vst [vmem:[#allocation5] sm:$0xff] %v1904
    %1931 = vst [vmem:[#allocation5 + $0x8] sm:$0xff] %v1911
    %1932 = vst [vmem:[#allocation5 + $0x10] sm:$0xff] %v1918
    %1933 = vst [vmem:[#allocation5 + $0x18] sm:$0xff] %v1925
    // Predicated region
    $region26: #{tpu_custom_call.1} parent=1 // pred_check
      _
    $region27: #{tpu_custom_call.1} parent=1 // pred_check_branch
      %1935 = sbr.rel (0) target = $region29
    $region28: #{tpu_custom_call.1} parent=1 // pred_region
      %s1937 = ssub.s32 512, 512
      %1938 = vsyncadd [#allocation4], %s1937
      %s1939 = sshll.u32 [#allocation5], 4
      %s1940 = int_to_ptr.vmem [resolvable:$true] %s1939
      %1945 = dma.vmem_to_hbm [thread:$0]  %s1940, 512, %s5, [#allocation4], 128, 128, 8
    $region29: #{tpu_custom_call.1} parent=1 // pred_fallthru
      _
    // Predicated region
    $region30: #{tpu_custom_call.1} parent=1 // pred_check
      _
    $region31: #{tpu_custom_call.1} parent=1 // pred_check_branch
      %1947 = sbr.rel (0) target = $region33
    $region32: #{tpu_custom_call.1} parent=1 // pred_region
      %1948 = dma.done [#allocation4], 512
    $region33: #{tpu_custom_call.1} parent=1 // pred_fallthru
      _
    %1949 = vsyncpa [#allocation3], 1
    %1950 = vsyncpa [#allocation4], 1

</llo_original>
